<compile_context>
chip_gen: v6e
topology: v6e:2x2x1
jax: 0.10.0
libtpu: 0.0.40
codegen_flags: <defaults>
</compile_context>

<pallas_src>
import math
import functools

import jax
import jax.numpy as jnp
from jax.experimental import pallas as pl
from jax.experimental.pallas import tpu as pltpu


_GELU_C = math.sqrt(2.0 / math.pi)


def _new_gelu_f32(h):
    # Exact tanh-approximation GELU from the reference, computed in f32.
    return 0.5 * h * (1.0 + jnp.tanh(_GELU_C * (h + 0.044715 * (h * h * h))))


def _round_up(v, m):
    return ((v + m - 1) // m) * m


def _vmem_budget():
    try:
        cap = int(pltpu.get_tpu_info().vmem_capacity_bytes)
    except Exception:
        cap = 64 << 20  # conservative fallback (v7x per-TC VMEM)
    return int(0.72 * cap)


# ----------------------------------------------------------------------------
# Kernels
# ----------------------------------------------------------------------------

def _mlp_kernel_resident(x_ref, wfc_ref, bfc_ref, wproj_ref, bproj_ref, o_ref):
    # Whole weights resident in VMEM; one grid axis over row tiles.
    h = jnp.dot(x_ref[...], wfc_ref[...], preferred_element_type=jnp.float32)
    h = h + bfc_ref[...].astype(jnp.float32)
    g = _new_gelu_f32(h)
    out = jnp.dot(g.astype(wproj_ref.dtype), wproj_ref[...],
                  preferred_element_type=jnp.float32)
    out = out + bproj_ref[...].astype(jnp.float32)
    o_ref[...] = out.astype(o_ref.dtype)           # dropout = identity (eval)


def _mlp_kernel_split(x_ref, wfc_ref, bfc_ref, wproj_ref, bproj_ref, o_ref, acc_ref):
    # Hidden axis chunked as the last ("arbitrary") grid axis; nk >= 2 guaranteed.
    k = pl.program_id(1)
    nk = pl.num_programs(1)

    h = jnp.dot(x_ref[...], wfc_ref[...], preferred_element_type=jnp.float32)
    h = h + bfc_ref[...].astype(jnp.float32)
    g = _new_gelu_f32(h)
    part = jnp.dot(g.astype(wproj_ref.dtype), wproj_ref[...],
                   preferred_element_type=jnp.float32)

    @pl.when(k == 0)
    def _():
        # Fold c_proj bias into the accumulator init.
        acc_ref[...] = part + bproj_ref[...].astype(jnp.float32)

    @pl.when(jnp.logical_and(k > 0, k < nk - 1))
    def _():
        acc_ref[...] = acc_ref[...] + part

    @pl.when(k == nk - 1)
    def _():
        # Fuse the final accumulate into the epilogue store (saves one f32 RMW).
        o_ref[...] = (acc_ref[...] + part).astype(o_ref.dtype)


# ----------------------------------------------------------------------------
# pallas_call builders
# ----------------------------------------------------------------------------

@functools.partial(jax.jit, static_argnames=("tm", "vmem_limit"))
def _mlp_resident_call(x2d, w_fc, b_fc, w_proj, b_proj, *, tm, vmem_limit):
    M, dim = x2d.shape
    hidden = w_fc.shape[1]
    itemsize = jnp.dtype(x2d.dtype).itemsize
    cost = pl.CostEstimate(
        flops=4 * M * dim * hidden,
        transcendentals=M * hidden,
        bytes_accessed=(2 * M * dim + 2 * dim * hidden + hidden + dim) * itemsize,
    )
    return pl.pallas_call(
        _mlp_kernel_resident,
        out_shape=jax.ShapeDtypeStruct((M, dim), x2d.dtype),
        grid_spec=pltpu.PrefetchScalarGridSpec(
            num_scalar_prefetch=0,
            grid=(M // tm,),
            in_specs=[
                pl.BlockSpec((tm, dim), lambda i: (i, 0)),        # x rows
                pl.BlockSpec((dim, hidden), lambda i: (0, 0)),    # W_fc (resident)
                pl.BlockSpec((1, hidden), lambda i: (0, 0)),      # b_fc
                pl.BlockSpec((hidden, dim), lambda i: (0, 0)),    # W_proj (resident)
                pl.BlockSpec((1, dim), lambda i: (0, 0)),         # b_proj
            ],
            out_specs=pl.BlockSpec((tm, dim), lambda i: (i, 0)),
        ),
        compiler_params=pltpu.CompilerParams(
            dimension_semantics=("parallel",),
            vmem_limit_bytes=vmem_limit,
        ),
        cost_estimate=cost,
    )(x2d, w_fc, b_fc, w_proj, b_proj)


@functools.partial(jax.jit, static_argnames=("tm", "th", "vmem_limit"))
def _mlp_split_call(x2d, w_fc, b_fc, w_proj, b_proj, *, tm, th, vmem_limit):
    M, dim = x2d.shape
    hidden = w_fc.shape[1]
    nk = hidden // th
    n_rows = M // tm
    itemsize = jnp.dtype(x2d.dtype).itemsize

    # k-major layout for W_fc so each (dim, th) chunk is one contiguous DMA slab.
    w_fc_k = jnp.transpose(w_fc.reshape(dim, nk, th), (1, 0, 2))   # (nk, dim, th)

    cost = pl.CostEstimate(
        flops=4 * M * dim * hidden,
        transcendentals=M * hidden,
        bytes_accessed=(2 * M * dim
                        + n_rows * (2 * dim * hidden + hidden + dim)) * itemsize,
    )
    return pl.pallas_call(
        _mlp_kernel_split,
        out_shape=jax.ShapeDtypeStruct((M, dim), x2d.dtype),
        grid_spec=pltpu.PrefetchScalarGridSpec(
            num_scalar_prefetch=0,
            grid=(n_rows, nk),
            in_specs=[
                pl.BlockSpec((tm, dim), lambda i, k: (i, 0)),          # x rows (resident over k)
                pl.BlockSpec((None, dim, th), lambda i, k: (k, 0, 0)),  # W_fc k-chunk (contiguous)
                pl.BlockSpec((1, th), lambda i, k: (0, k)),            # b_fc chunk
                pl.BlockSpec((th, dim), lambda i, k: (k, 0)),          # W_proj k-chunk (row slab)
                pl.BlockSpec((1, dim), lambda i, k: (0, 0)),           # b_proj
            ],
            out_specs=pl.BlockSpec((tm, dim), lambda i, k: (i, 0)),
            scratch_shapes=[pltpu.VMEM((tm, dim), jnp.float32)],
        ),
        compiler_params=pltpu.CompilerParams(
            dimension_semantics=("parallel", "arbitrary"),
            vmem_limit_bytes=vmem_limit,
        ),
        cost_estimate=cost,
    )(x2d, w_fc_k, b_fc, w_proj, b_proj)


# ----------------------------------------------------------------------------
# Wrapper
# ----------------------------------------------------------------------------

def mlp_pallas(x, w_fc, b_fc, w_proj, b_proj, *, tm=None, th=None,
               resident_weights=None):
    """x: [..., dim]; weights stored transposed vs torch, i.e. (in_features, out_features)."""
    *lead, dim = x.shape
    hidden = w_fc.shape[1]
    M = max(1, math.prod(lead))
    itemsize = jnp.dtype(x.dtype).itemsize
    budget = _vmem_budget()

    # ---- hidden-chunk size: largest multiple of 128 dividing hidden, <= requested ----
    th_req = 512 if th is None else th
    if hidden % 128 != 0:
        th_sel = hidden                       # tiny/odd model: no clean 128-split
    else:
        th_req = max(128, min(_round_up(th_req, 128), hidden))
        th_sel = 128
        for c in range(128, th_req + 1, 128):
            if hidden % c == 0:
                th_sel = c
    nk = hidden // th_sel

    # ---- resident-weights decision (weights + estimated activations vs VMEM budget) ----
    if resident_weights is None:
        est_tm = 512
        est_total = (2 * (2 * dim * hidden + hidden + dim) * itemsize   # weights, 2 buffers
                     + 4 * est_tm * dim * itemsize                      # x + out tiles
                     + 2 * est_tm * hidden * 4)                         # f32 h/gelu intermediates
        resident = est_total <= int(0.8 * budget)
    else:
        resident = bool(resident_weights)
    if nk == 1:
        resident = True   # nothing to chunk -> use the single-pass kernel

    # ---- row tile: multiple of 128, minimal padding, prefer large ----
    if tm is None:
        tm_req = 512 if resident else 768     # streamed weights need tm >= HBM roofline
    else:
        tm_req = tm
    tm_req = max(128, _round_up(tm_req, 128))
    tm_cap = min(tm_req, _round_up(M, 128))
    best_tm, best_pad = None, None
    for c in range(128, tm_cap + 1, 128):
        pad = _round_up(M, c) - M
        if best_pad is None or pad < best_pad or (pad == best_pad and c > best_tm):
            best_tm, best_pad = c, pad
    tm_sel = best_tm
    M_pad = _round_up(M, tm_sel)
    # v7x megacore: give the "parallel" row axis >= 2 programs when possible.
    if M_pad // tm_sel == 1 and tm_sel >= 256 and M > tm_sel // 2:
        tm_sel //= 2
        M_pad = _round_up(M, tm_sel)

    # ---- pad rows and run ----
    x2d = x.reshape(M, dim)
    if M_pad != M:
        x2d = jnp.pad(x2d, ((0, M_pad - M), (0, 0)))
    b_fc2 = b_fc.reshape(1, hidden)
    b_proj2 = b_proj.reshape(1, dim)

    if resident:
        resident_bytes = (2 * (2 * dim * hidden + hidden + dim) * itemsize
                          + 4 * tm_sel * dim * itemsize
                          + 2 * tm_sel * hidden * 4)
        vmem_limit = int(min(max(int(1.2 * resident_bytes), 32 << 20), budget))
        out2d = _mlp_resident_call(x2d, w_fc, b_fc2, w_proj, b_proj2,
                                   tm=tm_sel, vmem_limit=vmem_limit)
    else:
        split_bytes = (4 * tm_sel * dim * itemsize                       # x + out (2 buffers)
                       + 2 * (2 * dim * th_sel + th_sel + dim) * itemsize  # weight/bias chunks
                       + tm_sel * dim * 4                                 # f32 accumulator
                       + 2 * tm_sel * th_sel * 4)                         # f32 intermediates
        vmem_limit = int(min(max(int(1.3 * split_bytes), 32 << 20), budget))
        out2d = _mlp_split_call(x2d, w_fc, b_fc2, w_proj, b_proj2,
                                tm=tm_sel, th=th_sel, vmem_limit=vmem_limit)

    return out2d[:M].reshape(*lead, dim)


def _reference_mlp(x, w_fc, b_fc, w_proj, b_proj):
    h = x @ w_fc + b_fc.reshape(-1)
    g = 0.5 * h * (1.0 + jnp.tanh(_GELU_C * (h + 0.044715 * h ** 3)))
    return g @ w_proj + b_proj.reshape(-1)


# TODO(synk): train-mode nn.Dropout (stochastic masking) is not implemented; eval-mode
# dropout is the identity, which matches the inference forward pass here.

if __name__ == "__main__":
    # Small, lane-dense shapes: batch=2, seq=8, dim=128, hidden=4*dim=512.
    B, S, dim = 2, 8, 128
    hidden = 4 * dim

    key = jax.random.PRNGKey(0)
    kx, kwf, kbf, kwp, kbp = jax.random.split(key, 5)

    x = jax.random.normal(kx, (B, S, dim), dtype=jnp.float32)
    # torch nn.Linear stores (out, in); we keep the transposed (in, out) layout.
    w_fc = jax.random.normal(kwf, (dim, hidden), dtype=jnp.float32) / math.sqrt(dim)
    b_fc = jax.random.normal(kbf, (hidden,), dtype=jnp.float32) * 0.02
    w_proj = jax.random.normal(kwp, (hidden, dim), dtype=jnp.float32) / math.sqrt(hidden)
    b_proj = jax.random.normal(kbp, (dim,), dtype=jnp.float32) * 0.02

    ref = _reference_mlp(x, w_fc, b_fc, w_proj, b_proj)

    # 1) Auto path: weights fit in VMEM -> resident-weight kernel (1-D row grid).
    out = jax.block_until_ready(mlp_pallas(x, w_fc, b_fc, w_proj, b_proj))
    assert out.shape == (B, S, dim)
    assert jnp.allclose(out, ref, atol=1e-3, rtol=1e-3), "resident path mismatch"

    # 2) Forced streaming path: hidden chunked (nk=4), k-major W_fc, f32 accumulator.
    out_s = jax.block_until_ready(
        mlp_pallas(x, w_fc, b_fc, w_proj, b_proj, th=128, resident_weights=False))
    assert jnp.allclose(out_s, ref, atol=1e-3, rtol=1e-3), "split path mismatch"

    # 3) bf16 operands into the MXU (f32 accumulation inside the kernel).
    xb = x.astype(jnp.bfloat16)
    wfb, bfb = w_fc.astype(jnp.bfloat16), b_fc.astype(jnp.bfloat16)
    wpb, bpb = w_proj.astype(jnp.bfloat16), b_proj.astype(jnp.bfloat16)
    ref_b = _reference_mlp(xb.astype(jnp.float32), wfb.astype(jnp.float32),
                           bfb.astype(jnp.float32), wpb.astype(jnp.float32),
                           bpb.astype(jnp.float32))
    out_b = jax.block_until_ready(mlp_pallas(xb, wfb, bfb, wpb, bpb))
    assert jnp.allclose(out_b.astype(jnp.float32), ref_b, atol=5e-2, rtol=5e-2), \
        "bf16 path mismatch"

    print("KERNEL_OK")
</pallas_src>

<mosaic_0001>
module attributes {stable_mosaic.version = 11 : i64} {
  func.func @_mlp_kernel_resident(%arg0: i32, %arg1: memref<128x128xf32, #tpu.memory_space<vmem>>, %arg2: memref<128x512xf32, #tpu.memory_space<vmem>>, %arg3: memref<1x512xf32, #tpu.memory_space<vmem>>, %arg4: memref<512x128xf32, #tpu.memory_space<vmem>>, %arg5: memref<1x128xf32, #tpu.memory_space<vmem>>, %arg6: memref<128x128xf32, #tpu.memory_space<vmem>>) attributes {dimension_semantics = [#tpu.dimension_semantics<parallel>], iteration_bounds = array<i64: 1>, scalar_prefetch = 0 : i64, scratch_operands = 0 : i64, tpu.core_type = #tpu.core_type<tc>, window_params = [{transform_indices = @transform_0, window_bounds = array<i64: 128, 128>}, {pipeline_mode = #tpu.pipeline_mode<synchronous>, transform_indices = @transform_1, window_bounds = array<i64: 128, 512>}, {pipeline_mode = #tpu.pipeline_mode<synchronous>, transform_indices = @transform_2, window_bounds = array<i64: 1, 512>}, {pipeline_mode = #tpu.pipeline_mode<synchronous>, transform_indices = @transform_3, window_bounds = array<i64: 512, 128>}, {pipeline_mode = #tpu.pipeline_mode<synchronous>, transform_indices = @transform_4, window_bounds = array<i64: 1, 128>}, {transform_indices = @transform_5, window_bounds = array<i64: 128, 128>}]} {
    %c0 = arith.constant 0 : index
    %c0_0 = arith.constant 0 : index
    %0 = vector.load %arg1[%c0, %c0_0] : memref<128x128xf32, #tpu.memory_space<vmem>>, vector<128x128xf32>
    %c0_1 = arith.constant 0 : index
    %c0_2 = arith.constant 0 : index
    %1 = vector.load %arg2[%c0_1, %c0_2] : memref<128x512xf32, #tpu.memory_space<vmem>>, vector<128x512xf32>
    %cst = arith.constant dense<0.000000e+00> : vector<128x512xf32>
    %2 = tpu.matmul %0, %1, %cst {dimension_numbers = #tpu.dot_dimension_numbers<[1], [0], [0], [1], [0, 0, 1, 1], [], []>} : vector<128x128xf32>, vector<128x512xf32>, vector<128x512xf32> -> vector<128x512xf32>
    %c0_3 = arith.constant 0 : index
    %c0_4 = arith.constant 0 : index
    %3 = vector.load %arg3[%c0_3, %c0_4] : memref<1x512xf32, #tpu.memory_space<vmem>>, vector<1x512xf32>
    %4 = vector.broadcast %3 : vector<1x512xf32> to vector<128x512xf32>
    %5 = arith.addf %2, %4 : vector<128x512xf32>
    %cst_5 = arith.constant 5.000000e-01 : f32
    %6 = vector.broadcast %cst_5 : f32 to vector<128x512xf32>
    %7 = arith.mulf %6, %5 : vector<128x512xf32>
    %8 = arith.mulf %5, %5 : vector<128x512xf32>
    %9 = arith.mulf %8, %5 : vector<128x512xf32>
    %cst_6 = arith.constant 4.471500e-02 : f32
    %10 = vector.broadcast %cst_6 : f32 to vector<128x512xf32>
    %11 = arith.mulf %10, %9 : vector<128x512xf32>
    %12 = arith.addf %5, %11 : vector<128x512xf32>
    %cst_7 = arith.constant 0.797884583 : f32
    %13 = vector.broadcast %cst_7 : f32 to vector<128x512xf32>
    %14 = arith.mulf %13, %12 : vector<128x512xf32>
    %15 = math.tanh %14 : vector<128x512xf32>
    %cst_8 = arith.constant 1.000000e+00 : f32
    %16 = vector.broadcast %cst_8 : f32 to vector<128x512xf32>
    %17 = arith.addf %16, %15 : vector<128x512xf32>
    %18 = arith.mulf %7, %17 : vector<128x512xf32>
    %c0_9 = arith.constant 0 : index
    %c0_10 = arith.constant 0 : index
    %19 = vector.load %arg4[%c0_9, %c0_10] : memref<512x128xf32, #tpu.memory_space<vmem>>, vector<512x128xf32>
    %cst_11 = arith.constant dense<0.000000e+00> : vector<128x128xf32>
    %20 = tpu.matmul %18, %19, %cst_11 {dimension_numbers = #tpu.dot_dimension_numbers<[1], [0], [0], [1], [0, 0, 1, 1], [], []>} : vector<128x512xf32>, vector<512x128xf32>, vector<128x128xf32> -> vector<128x128xf32>
    %c0_12 = arith.constant 0 : index
    %c0_13 = arith.constant 0 : index
    %21 = vector.load %arg5[%c0_12, %c0_13] : memref<1x128xf32, #tpu.memory_space<vmem>>, vector<1x128xf32>
    %22 = vector.broadcast %21 : vector<1x128xf32> to vector<128x128xf32>
    %23 = arith.addf %20, %22 : vector<128x128xf32>
    %c0_14 = arith.constant 0 : index
    %c0_15 = arith.constant 0 : index
    %24 = vector.load %arg6[%c0_14, %c0_15] : memref<128x128xf32, #tpu.memory_space<vmem>>, vector<128x128xf32>
    tpu.vector_store %arg6[%c0_14, %c0_15], %23 {strides = array<i32>} : memref<128x128xf32, #tpu.memory_space<vmem>>, vector<128x128xf32>,
    return
  }
  func.func @transform_0(%arg0: i32) -> (i32, i32) {
    %c0_i32 = arith.constant 0 : i32
    %c0_i32_0 = arith.constant 0 : i32
    return %arg0, %c0_i32 : i32, i32
  }
  func.func @transform_1(%arg0: i32) -> (i32, i32) {
    %c0_i32 = arith.constant 0 : i32
    %c0_i32_0 = arith.constant 0 : i32
    %c0_i32_1 = arith.constant 0 : i32
    return %c0_i32, %c0_i32_0 : i32, i32
  }
  func.func @transform_2(%arg0: i32) -> (i32, i32) {
    %c0_i32 = arith.constant 0 : i32
    %c0_i32_0 = arith.constant 0 : i32
    %c0_i32_1 = arith.constant 0 : i32
    return %c0_i32, %c0_i32_0 : i32, i32
  }
  func.func @transform_3(%arg0: i32) -> (i32, i32) {
    %c0_i32 = arith.constant 0 : i32
    %c0_i32_0 = arith.constant 0 : i32
    %c0_i32_1 = arith.constant 0 : i32
    return %c0_i32, %c0_i32_0 : i32, i32
  }
  func.func @transform_4(%arg0: i32) -> (i32, i32) {
    %c0_i32 = arith.constant 0 : i32
    %c0_i32_0 = arith.constant 0 : i32
    %c0_i32_1 = arith.constant 0 : i32
    return %c0_i32, %c0_i32_0 : i32, i32
  }
  func.func @transform_5(%arg0: i32) -> (i32, i32) {
    %c0_i32 = arith.constant 0 : i32
    %c0_i32_0 = arith.constant 0 : i32
    return %arg0, %c0_i32 : i32, i32
  }
}

</mosaic_0001>

<llo_original>
// kernel: _mlp_resident_call.1
$region0: #{_mlp_resident_call.1}
  #allocation0 [shape = 'u32[]', space=smem, size = 0x4, offset = 0x4, fixed_abs, tag = 'smem constant byte address 0x4 - core index']
  #allocation1 [shape = 'u32[144,128]{1,0:T(1,128)}', space=vmem, size = 0x12000, scoped, tag = 'internal scratch']
  %s0 = inlined_call_operand.hbm [shape: f32[128,128], index: 0, kind: input, shape index: {}]
  %s1 = inlined_call_operand.hbm [shape: f32[128,512], index: 1, kind: input, shape index: {}]
  %s2 = inlined_call_operand.hbm [shape: f32[1,512], index: 2, kind: input, shape index: {}]
  %s3 = inlined_call_operand.hbm [shape: f32[512,128], index: 3, kind: input, shape index: {}]
  %s4 = inlined_call_operand.vmem [shape: f32[1,128], index: 4, kind: input, shape index: {}]
  %s5 = inlined_call_operand.hbm [shape: f32[128,128], index: 5, kind: output, shape index: {}]
  %s6 = sld [smem:[#allocation0]]
  $region46: #{_mlp_resident_call.1} parent=0
    _
  %s8 = ssub.s32 1, %s6
  %s9 = scalar_select 0, %s8, %s6
  $region1: #{_mlp_resident_call.1} parent=0
    #allocation2 [shape = 'u8[65536]{0}', space=vmem, size = 0x10000, scoped, tag = 'input window, operand 0, single buffered']
    #allocation3 [shape = 's32[1]{0}', space=sflag, size = 0x4, scoped, tag = 'scoped memory for _mlp_resident_call.1']
    #allocation4 [shape = 's32[1]{0}', space=sflag, size = 0x4, scoped, tag = 'scoped memory for _mlp_resident_call.1']
    #allocation5 [shape = 'u8[262144]{0}', space=vmem, size = 0x40000, scoped, tag = 'input window, operand 1, single buffered']
    #allocation6 [shape = 's32[1]{0}', space=sflag, size = 0x4, scoped, tag = 'scoped memory for _mlp_resident_call.1']
    #allocation7 [shape = 'u8[2048]{0}', space=vmem, size = 0x800, scoped, tag = 'input window, operand 2, single buffered']
    #allocation8 [shape = 'u8[262144]{0}', space=vmem, size = 0x40000, scoped, tag = 'input window, operand 3, single buffered']
    #allocation9 [shape = 's32[1]{0}', space=sflag, size = 0x4, scoped, tag = 'scoped memory for _mlp_resident_call.1']
    #allocation10 [shape = 'u8[65536]{0}', space=vmem, size = 0x10000, scoped, tag = 'output window, operand 0, single buffered']
    %10 = vsyncpa [#allocation3], 0
    %11 = vsyncpa [#allocation6], 0
    %12 = vsyncpa [#allocation9], 0
    %13 = vsyncpa [#allocation4], 0
    // Predicated region
    $region2: #{_mlp_resident_call.1} parent=1 // pred_check
      _
    $region3: #{_mlp_resident_call.1} parent=1 // pred_check_branch
      %15 = sbr.rel (0) target = $region5
    $region4: #{_mlp_resident_call.1} parent=1 // pred_region
      %s17 = ssub.s32 2048, 2048
      %18 = vsyncadd [#allocation3], %s17
      %s19 = sshll.u32 [#allocation2], 4
      %s20 = int_to_ptr.vmem [resolvable:$true] %s19
      %25 = dma.hbm_to_vmem [thread:$0]  %s0, 2048, %s20, [#allocation3], 128, 128, 8
    $region5: #{_mlp_resident_call.1} parent=1 // pred_fallthru
      _
    // Predicated region
    $region6: #{_mlp_resident_call.1} parent=1 // pred_check
      _
    $region7: #{_mlp_resident_call.1} parent=1 // pred_check_branch
      %27 = sbr.rel (0) target = $region9
    $region8: #{_mlp_resident_call.1} parent=1 // pred_region
      %s29 = ssub.s32 8192, 8192
      %30 = vsyncadd [#allocation6], %s29
      %s31 = sshll.u32 [#allocation5], 4
      %s32 = int_to_ptr.vmem [resolvable:$true] %s31
      %37 = dma.hbm_to_vmem [thread:$0]  %s1, 8192, %s32, [#allocation6], 512, 512, 32
    $region9: #{_mlp_resident_call.1} parent=1 // pred_fallthru
      _
    // Predicated region
    $region10: #{_mlp_resident_call.1} parent=1 // pred_check
      _
    $region11: #{_mlp_resident_call.1} parent=1 // pred_check_branch
      %39 = sbr.rel (0) target = $region13
    $region12: #{_mlp_resident_call.1} parent=1 // pred_region
      %s41 = ssub.s32 64, 64
      %42 = vsyncadd [#allocation6], %s41
      %s44 = sshll.u32 [#allocation7], 4
      %s45 = int_to_ptr.vmem [resolvable:$true] %s44
      %47 = dma.hbm_to_vmem [thread:$0]  %s2, 64, %s45, [#allocation6]
    $region13: #{_mlp_resident_call.1} parent=1 // pred_fallthru
      _
    // Predicated region
    $region14: #{_mlp_resident_call.1} parent=1 // pred_check
      _
    $region15: #{_mlp_resident_call.1} parent=1 // pred_check_branch
      %49 = sbr.rel (0) target = $region17
    $region16: #{_mlp_resident_call.1} parent=1 // pred_region
      %s51 = ssub.s32 8192, 8192
      %52 = vsyncadd [#allocation9], %s51
      %s53 = sshll.u32 [#allocation8], 4
      %s54 = int_to_ptr.vmem [resolvable:$true] %s53
      %59 = dma.hbm_to_vmem [thread:$0]  %s3, 8192, %s54, [#allocation9], 128, 128, 8
    $region17: #{_mlp_resident_call.1} parent=1 // pred_fallthru
      _
    // Predicated region
    $region18: #{_mlp_resident_call.1} parent=1 // pred_check
      _
    $region19: #{_mlp_resident_call.1} parent=1 // pred_check_branch
      %61 = sbr.rel (0) target = $region21
    $region20: #{_mlp_resident_call.1} parent=1 // pred_region
      _
    $region21: #{_mlp_resident_call.1} parent=1 // pred_fallthru
      _
    // Predicated region
    $region22: #{_mlp_resident_call.1} parent=1 // pred_check
      _
    $region23: #{_mlp_resident_call.1} parent=1 // pred_check_branch
      %63 = sbr.rel (0) target = $region25
    $region24: #{_mlp_resident_call.1} parent=1 // pred_region
      %64 = dma.done [#allocation3], 2048
    $region25: #{_mlp_resident_call.1} parent=1 // pred_fallthru
      _
    // Predicated region
    $region26: #{_mlp_resident_call.1} parent=1 // pred_check
      _
    $region27: #{_mlp_resident_call.1} parent=1 // pred_check_branch
      %66 = sbr.rel (0) target = $region29
    $region28: #{_mlp_resident_call.1} parent=1 // pred_region
      %67 = dma.done [#allocation6], 8192
    $region29: #{_mlp_resident_call.1} parent=1 // pred_fallthru
      _
    // Predicated region
    $region30: #{_mlp_resident_call.1} parent=1 // pred_check
      _
    $region31: #{_mlp_resident_call.1} parent=1 // pred_check_branch
      %69 = sbr.rel (0) target = $region33
    $region32: #{_mlp_resident_call.1} parent=1 // pred_region
      %70 = dma.done [#allocation6], 64
    $region33: #{_mlp_resident_call.1} parent=1 // pred_fallthru
      _
    // Predicated region
    $region34: #{_mlp_resident_call.1} parent=1 // pred_check
      _
    $region35: #{_mlp_resident_call.1} parent=1 // pred_check_branch
      %72 = sbr.rel (0) target = $region37
    $region36: #{_mlp_resident_call.1} parent=1 // pred_region
      %73 = dma.done [#allocation9], 8192
    $region37: #{_mlp_resident_call.1} parent=1 // pred_fallthru
      _
    %v74 = vld [vmem:[#allocation2] sm:$0xff]
    %v75 = vld [vmem:[#allocation2 + $0x8] sm:$0xff]
    %v76 = vld [vmem:[#allocation2 + $0x10] sm:$0xff]
    %v77 = vld [vmem:[#allocation2 + $0x18] sm:$0xff]
    %v78 = vld [vmem:[#allocation2 + $0x20] sm:$0xff]
    %v79 = vld [vmem:[#allocation2 + $0x28] sm:$0xff]
    %v80 = vld [vmem:[#allocation2 + $0x30] sm:$0xff]
    %v81 = vld [vmem:[#allocation2 + $0x38] sm:$0xff]
    %v82 = vld [vmem:[#allocation2 + $0x40] sm:$0xff]
    %v83 = vld [vmem:[#allocation2 + $0x48] sm:$0xff]
    %v84 = vld [vmem:[#allocation2 + $0x50] sm:$0xff]
    %v85 = vld [vmem:[#allocation2 + $0x58] sm:$0xff]
    %v86 = vld [vmem:[#allocation2 + $0x60] sm:$0xff]
    %v87 = vld [vmem:[#allocation2 + $0x68] sm:$0xff]
    %v88 = vld [vmem:[#allocation2 + $0x70] sm:$0xff]
    %v89 = vld [vmem:[#allocation2 + $0x78] sm:$0xff]
    %v90 = vld [vmem:[#allocation5] sm:$0xff]
    %v91 = vld [vmem:[#allocation5 + $0x8] sm:$0xff]
    %v92 = vld [vmem:[#allocation5 + $0x10] sm:$0xff]
    %v93 = vld [vmem:[#allocation5 + $0x18] sm:$0xff]
    %v94 = vld [vmem:[#allocation5 + $0x20] sm:$0xff]
    %v95 = vld [vmem:[#allocation5 + $0x28] sm:$0xff]
    %v96 = vld [vmem:[#allocation5 + $0x30] sm:$0xff]
    %v97 = vld [vmem:[#allocation5 + $0x38] sm:$0xff]
    %v98 = vld [vmem:[#allocation5 + $0x40] sm:$0xff]
    %v99 = vld [vmem:[#allocation5 + $0x48] sm:$0xff]
    %v100 = vld [vmem:[#allocation5 + $0x50] sm:$0xff]
    %v101 = vld [vmem:[#allocation5 + $0x58] sm:$0xff]
    %v102 = vld [vmem:[#allocation5 + $0x60] sm:$0xff]
    %v103 = vld [vmem:[#allocation5 + $0x68] sm:$0xff]
    %v104 = vld [vmem:[#allocation5 + $0x70] sm:$0xff]
    %v105 = vld [vmem:[#allocation5 + $0x78] sm:$0xff]
    %v106 = vld [vmem:[#allocation5 + $0x80] sm:$0xff]
    %v107 = vld [vmem:[#allocation5 + $0x88] sm:$0xff]
    %v108 = vld [vmem:[#allocation5 + $0x90] sm:$0xff]
    %v109 = vld [vmem:[#allocation5 + $0x98] sm:$0xff]
    %v110 = vld [vmem:[#allocation5 + $0xa0] sm:$0xff]
    %v111 = vld [vmem:[#allocation5 + $0xa8] sm:$0xff]
    %v112 = vld [vmem:[#allocation5 + $0xb0] sm:$0xff]
    %v113 = vld [vmem:[#allocation5 + $0xb8] sm:$0xff]
    %v114 = vld [vmem:[#allocation5 + $0xc0] sm:$0xff]
    %v115 = vld [vmem:[#allocation5 + $0xc8] sm:$0xff]
    %v116 = vld [vmem:[#allocation5 + $0xd0] sm:$0xff]
    %v117 = vld [vmem:[#allocation5 + $0xd8] sm:$0xff]
    %v118 = vld [vmem:[#allocation5 + $0xe0] sm:$0xff]
    %v119 = vld [vmem:[#allocation5 + $0xe8] sm:$0xff]
    %v120 = vld [vmem:[#allocation5 + $0xf0] sm:$0xff]
    %v121 = vld [vmem:[#allocation5 + $0xf8] sm:$0xff]
    %v122 = vld [vmem:[#allocation5 + $0x100] sm:$0xff]
    %v123 = vld [vmem:[#allocation5 + $0x108] sm:$0xff]
    %v124 = vld [vmem:[#allocation5 + $0x110] sm:$0xff]
    %v125 = vld [vmem:[#allocation5 + $0x118] sm:$0xff]
    %v126 = vld [vmem:[#allocation5 + $0x120] sm:$0xff]
    %v127 = vld [vmem:[#allocation5 + $0x128] sm:$0xff]
    %v128 = vld [vmem:[#allocation5 + $0x130] sm:$0xff]
    %v129 = vld [vmem:[#allocation5 + $0x138] sm:$0xff]
    %v130 = vld [vmem:[#allocation5 + $0x140] sm:$0xff]
    %v131 = vld [vmem:[#allocation5 + $0x148] sm:$0xff]
    %v132 = vld [vmem:[#allocation5 + $0x150] sm:$0xff]
    %v133 = vld [vmem:[#allocation5 + $0x158] sm:$0xff]
    %v134 = vld [vmem:[#allocation5 + $0x160] sm:$0xff]
    %v135 = vld [vmem:[#allocation5 + $0x168] sm:$0xff]
    %v136 = vld [vmem:[#allocation5 + $0x170] sm:$0xff]
    %v137 = vld [vmem:[#allocation5 + $0x178] sm:$0xff]
    %v138 = vld [vmem:[#allocation5 + $0x180] sm:$0xff]
    %v139 = vld [vmem:[#allocation5 + $0x188] sm:$0xff]
    %v140 = vld [vmem:[#allocation5 + $0x190] sm:$0xff]
    %v141 = vld [vmem:[#allocation5 + $0x198] sm:$0xff]
    %v142 = vld [vmem:[#allocation5 + $0x1a0] sm:$0xff]
    %v143 = vld [vmem:[#allocation5 + $0x1a8] sm:$0xff]
    %v144 = vld [vmem:[#allocation5 + $0x1b0] sm:$0xff]
    %v145 = vld [vmem:[#allocation5 + $0x1b8] sm:$0xff]
    %v146 = vld [vmem:[#allocation5 + $0x1c0] sm:$0xff]
    %v147 = vld [vmem:[#allocation5 + $0x1c8] sm:$0xff]
    %v148 = vld [vmem:[#allocation5 + $0x1d0] sm:$0xff]
    %v149 = vld [vmem:[#allocation5 + $0x1d8] sm:$0xff]
    %v150 = vld [vmem:[#allocation5 + $0x1e0] sm:$0xff]
    %v151 = vld [vmem:[#allocation5 + $0x1e8] sm:$0xff]
    %v152 = vld [vmem:[#allocation5 + $0x1f0] sm:$0xff]
    %v153 = vld [vmem:[#allocation5 + $0x1f8] sm:$0xff]
    %v154 = vld [vmem:[#allocation7] sm:$0xf]
    %v156 = vlaneseq
    %v157 = vshrl.u32 %v156, 7
    %v158 = vsub.s32 0, %v157
    %v159 = vrot.slane %v154, %v158
    %v160 = vlaneseq
    %v161 = vshrl.u32 %v160, 7
    %v162 = vsub.s32 1, %v161
    %v163 = vrot.slane %v154, %v162
    %v164 = vlaneseq
    %v165 = vshrl.u32 %v164, 7
    %v166 = vsub.s32 2, %v165
    %v167 = vrot.slane %v154, %v166
    %v168 = vlaneseq
    %v169 = vshrl.u32 %v168, 7
    %v170 = vsub.s32 3, %v169
    %v171 = vrot.slane %v154, %v170
    %176 = vmatprep.subr.mxu0 %v151
    %177 = vmatpush1.msra.mxu0 %v150
    %178 = vmatprep.subr.mxu0 %v147
    %179 = vmatpush1.msra.mxu0 %v146
    %180 = vmatprep.subr.mxu0 %v143
    %181 = vmatpush1.msra.mxu0 %v142
    %182 = vmatprep.subr.mxu0 %v139
    %183 = vmatpush1.msra.mxu0 %v138
    %184 = vmatprep.subr.mxu0 %v135
    %185 = vmatpush1.msra.mxu0 %v134
    %186 = vmatprep.subr.mxu0 %v131
    %187 = vmatpush1.msra.mxu0 %v130
    %188 = vmatprep.subr.mxu0 %v127
    %189 = vmatpush1.msra.mxu0 %v126
    %190 = vmatprep.subr.mxu0 %v123
    %191 = vmatpush1.msra.mxu0 %v122
    %192 = vmatprep.subr.mxu0 %v119
    %193 = vmatpush1.msra.mxu0 %v118
    %194 = vmatprep.subr.mxu0 %v115
    %195 = vmatpush1.msra.mxu0 %v114
    %196 = vmatprep.subr.mxu0 %v111
    %197 = vmatpush1.msra.mxu0 %v110
    %198 = vmatprep.subr.mxu0 %v107
    %199 = vmatpush1.msra.mxu0 %v106
    %200 = vmatprep.subr.mxu0 %v103
    %201 = vmatpush1.msra.mxu0 %v102
    %202 = vmatprep.subr.mxu0 %v99
    %203 = vmatpush1.msra.mxu0 %v98
    %204 = vmatprep.subr.mxu0 %v95
    %205 = vmatpush1.msra.mxu0 %v94
    %206 = vmatprep.subr.mxu0 %v91
    %207 = vmatpush1.msra.mxu0 %v90
    %208 = vmatprep.subr.mxu0 0.0
    %209 = vmatpush2.msra.mxu0 0.0
    %210 = vmatprep.subr.mxu0 0.0
    %211 = vmatpush2.msra.mxu0 0.0
    %212 = vmatprep.subr.mxu0 0.0
    %213 = vmatpush2.msra.mxu0 0.0
    %214 = vmatprep.subr.mxu0 0.0
    %215 = vmatpush2.msra.mxu0 0.0
    %216 = vmatprep.subr.mxu0 0.0
    %217 = vmatpush2.msra.mxu0 0.0
    %218 = vmatprep.subr.mxu0 0.0
    %219 = vmatpush2.msra.mxu0 0.0
    %220 = vmatprep.subr.mxu0 0.0
    %221 = vmatpush2.msra.mxu0 0.0
    %222 = vmatprep.subr.mxu0 0.0
    %223 = vmatpush2.msra.mxu0 0.0
    %224 = vmatprep.subr.mxu0 0.0
    %225 = vmatpush2.msra.mxu0 0.0
    %226 = vmatprep.subr.mxu0 0.0
    %227 = vmatpush2.msra.mxu0 0.0
    %228 = vmatprep.subr.mxu0 0.0
    %229 = vmatpush2.msra.mxu0 0.0
    %230 = vmatprep.subr.mxu0 0.0
    %231 = vmatpush2.msra.mxu0 0.0
    %232 = vmatprep.subr.mxu0 0.0
    %233 = vmatpush2.msra.mxu0 0.0
    %234 = vmatprep.subr.mxu0 0.0
    %235 = vmatpush2.msra.mxu0 0.0
    %236 = vmatprep.subr.mxu0 0.0
    %237 = vmatpush2.msra.mxu0 0.0
    %238 = vmatprep.subr.mxu0 0.0
    %239 = vmatpush2.msra.mxu0 0.0
    %240 = vmatprep.mubr.f32.mxu0 0.0
    %241 = vmatmul.mubr.f32.gmra.mxu0 %v74
    %v242 = vpop.f32.mrf.mxu0
    %v243 = vadd.f32 %v159, %v242
    %v244 = vpop.f32.mrf.mxu0
    %v245 = vadd.f32 %v163, %v244
    %246 = vmatprep.mubr.f32.mxu0 0.0
    %247 = vmatmul.mubr.f32.gmra.mxu0 %v75
    %v248 = vpop.f32.mrf.mxu0
    %v249 = vadd.f32 %v159, %v248
    %v250 = vpop.f32.mrf.mxu0
    %v251 = vadd.f32 %v163, %v250
    %252 = vmatprep.mubr.f32.mxu0 0.0
    %253 = vmatmul.mubr.f32.gmra.mxu0 %v76
    %v254 = vpop.f32.mrf.mxu0
    %v255 = vadd.f32 %v159, %v254
    %v256 = vpop.f32.mrf.mxu0
    %v257 = vadd.f32 %v163, %v256
    %258 = vmatprep.mubr.f32.mxu0 0.0
    %259 = vmatmul.mubr.f32.gmra.mxu0 %v77
    %v260 = vpop.f32.mrf.mxu0
    %v261 = vadd.f32 %v159, %v260
    %v262 = vpop.f32.mrf.mxu0
    %v263 = vadd.f32 %v163, %v262
    %264 = vmatprep.mubr.f32.mxu0 0.0
    %265 = vmatmul.mubr.f32.gmra.mxu0 %v78
    %v266 = vpop.f32.mrf.mxu0
    %v267 = vadd.f32 %v159, %v266
    %v268 = vpop.f32.mrf.mxu0
    %v269 = vadd.f32 %v163, %v268
    %270 = vmatprep.mubr.f32.mxu0 0.0
    %271 = vmatmul.mubr.f32.gmra.mxu0 %v79
    %v272 = vpop.f32.mrf.mxu0
    %v273 = vadd.f32 %v159, %v272
    %v274 = vpop.f32.mrf.mxu0
    %v275 = vadd.f32 %v163, %v274
    %276 = vmatprep.mubr.f32.mxu0 0.0
    %277 = vmatmul.mubr.f32.gmra.mxu0 %v80
    %v278 = vpop.f32.mrf.mxu0
    %v279 = vadd.f32 %v159, %v278
    %v280 = vpop.f32.mrf.mxu0
    %v281 = vadd.f32 %v163, %v280
    %282 = vmatprep.mubr.f32.mxu0 0.0
    %283 = vmatmul.mubr.f32.gmra.mxu0 %v81
    %v284 = vpop.f32.mrf.mxu0
    %v285 = vadd.f32 %v159, %v284
    %v286 = vpop.f32.mrf.mxu0
    %v287 = vadd.f32 %v163, %v286
    %288 = vmatprep.mubr.f32.mxu0 0.0
    %289 = vmatmul.mubr.f32.gmra.mxu0 %v82
    %v290 = vpop.f32.mrf.mxu0
    %v291 = vadd.f32 %v159, %v290
    %v292 = vpop.f32.mrf.mxu0
    %v293 = vadd.f32 %v163, %v292
    %294 = vmatprep.mubr.f32.mxu0 0.0
    %295 = vmatmul.mubr.f32.gmra.mxu0 %v83
    %v296 = vpop.f32.mrf.mxu0
    %v297 = vadd.f32 %v159, %v296
    %v298 = vpop.f32.mrf.mxu0
    %v299 = vadd.f32 %v163, %v298
    %300 = vmatprep.mubr.f32.mxu0 0.0
    %301 = vmatmul.mubr.f32.gmra.mxu0 %v84
    %v302 = vpop.f32.mrf.mxu0
    %v303 = vadd.f32 %v159, %v302
    %v304 = vpop.f32.mrf.mxu0
    %v305 = vadd.f32 %v163, %v304
    %306 = vmatprep.mubr.f32.mxu0 0.0
    %307 = vmatmul.mubr.f32.gmra.mxu0 %v85
    %v308 = vpop.f32.mrf.mxu0
    %v309 = vadd.f32 %v159, %v308
    %v310 = vpop.f32.mrf.mxu0
    %v311 = vadd.f32 %v163, %v310
    %312 = vmatprep.mubr.f32.mxu0 0.0
    %313 = vmatmul.mubr.f32.gmra.mxu0 %v86
    %v314 = vpop.f32.mrf.mxu0
    %v315 = vadd.f32 %v159, %v314
    %v316 = vpop.f32.mrf.mxu0
    %v317 = vadd.f32 %v163, %v316
    %318 = vmatprep.mubr.f32.mxu0 0.0
    %319 = vmatmul.mubr.f32.gmra.mxu0 %v87
    %v320 = vpop.f32.mrf.mxu0
    %v321 = vadd.f32 %v159, %v320
    %v322 = vpop.f32.mrf.mxu0
    %v323 = vadd.f32 %v163, %v322
    %324 = vmatprep.mubr.f32.mxu0 0.0
    %325 = vmatmul.mubr.f32.gmra.mxu0 %v88
    %v326 = vpop.f32.mrf.mxu0
    %v327 = vadd.f32 %v159, %v326
    %v328 = vpop.f32.mrf.mxu0
    %v329 = vadd.f32 %v163, %v328
    %330 = vmatprep.mubr.f32.mxu0 0.0
    %331 = vmatmul.mubr.f32.gmra.mxu0 %v89
    %v332 = vpop.f32.mrf.mxu0
    %v333 = vadd.f32 %v159, %v332
    %v334 = vpop.f32.mrf.mxu0
    %v335 = vadd.f32 %v163, %v334
    %336 = vdwg.mxu0
    %337 = vmatprep.subr.mxu0 %v153
    %338 = vmatpush1.msra.mxu0 %v152
    %339 = vmatprep.subr.mxu0 %v149
    %340 = vmatpush1.msra.mxu0 %v148
    %341 = vmatprep.subr.mxu0 %v145
    %342 = vmatpush1.msra.mxu0 %v144
    %343 = vmatprep.subr.mxu0 %v141
    %344 = vmatpush1.msra.mxu0 %v140
    %345 = vmatprep.subr.mxu0 %v137
    %346 = vmatpush1.msra.mxu0 %v136
    %347 = vmatprep.subr.mxu0 %v133
    %348 = vmatpush1.msra.mxu0 %v132
    %349 = vmatprep.subr.mxu0 %v129
    %350 = vmatpush1.msra.mxu0 %v128
    %351 = vmatprep.subr.mxu0 %v125
    %352 = vmatpush1.msra.mxu0 %v124
    %353 = vmatprep.subr.mxu0 %v121
    %354 = vmatpush1.msra.mxu0 %v120
    %355 = vmatprep.subr.mxu0 %v117
    %356 = vmatpush1.msra.mxu0 %v116
    %357 = vmatprep.subr.mxu0 %v113
    %358 = vmatpush1.msra.mxu0 %v112
    %359 = vmatprep.subr.mxu0 %v109
    %360 = vmatpush1.msra.mxu0 %v108
    %361 = vmatprep.subr.mxu0 %v105
    %362 = vmatpush1.msra.mxu0 %v104
    %363 = vmatprep.subr.mxu0 %v101
    %364 = vmatpush1.msra.mxu0 %v100
    %365 = vmatprep.subr.mxu0 %v97
    %366 = vmatpush1.msra.mxu0 %v96
    %367 = vmatprep.subr.mxu0 %v93
    %368 = vmatpush1.msra.mxu0 %v92
    %369 = vmatprep.subr.mxu0 0.0
    %370 = vmatpush2.msra.mxu0 0.0
    %371 = vmatprep.subr.mxu0 0.0
    %372 = vmatpush2.msra.mxu0 0.0
    %373 = vmatprep.subr.mxu0 0.0
    %374 = vmatpush2.msra.mxu0 0.0
    %375 = vmatprep.subr.mxu0 0.0
    %376 = vmatpush2.msra.mxu0 0.0
    %377 = vmatprep.subr.mxu0 0.0
    %378 = vmatpush2.msra.mxu0 0.0
    %379 = vmatprep.subr.mxu0 0.0
    %380 = vmatpush2.msra.mxu0 0.0
    %381 = vmatprep.subr.mxu0 0.0
    %382 = vmatpush2.msra.mxu0 0.0
    %383 = vmatprep.subr.mxu0 0.0
    %384 = vmatpush2.msra.mxu0 0.0
    %385 = vmatprep.subr.mxu0 0.0
    %386 = vmatpush2.msra.mxu0 0.0
    %387 = vmatprep.subr.mxu0 0.0
    %388 = vmatpush2.msra.mxu0 0.0
    %389 = vmatprep.subr.mxu0 0.0
    %390 = vmatpush2.msra.mxu0 0.0
    %391 = vmatprep.subr.mxu0 0.0
    %392 = vmatpush2.msra.mxu0 0.0
    %393 = vmatprep.subr.mxu0 0.0
    %394 = vmatpush2.msra.mxu0 0.0
    %395 = vmatprep.subr.mxu0 0.0
    %396 = vmatpush2.msra.mxu0 0.0
    %397 = vmatprep.subr.mxu0 0.0
    %398 = vmatpush2.msra.mxu0 0.0
    %399 = vmatprep.subr.mxu0 0.0
    %400 = vmatpush2.msra.mxu0 0.0
    %401 = vmatprep.mubr.f32.mxu0 0.0
    %402 = vmatmul.mubr.f32.gmra.mxu0 %v74
    %v403 = vpop.f32.mrf.mxu0
    %v404 = vadd.f32 %v167, %v403
    %v405 = vpop.f32.mrf.mxu0
    %v406 = vadd.f32 %v171, %v405
    %407 = vmatprep.mubr.f32.mxu0 0.0
    %408 = vmatmul.mubr.f32.gmra.mxu0 %v75
    %v409 = vpop.f32.mrf.mxu0
    %v410 = vadd.f32 %v167, %v409
    %v411 = vpop.f32.mrf.mxu0
    %v412 = vadd.f32 %v171, %v411
    %413 = vmatprep.mubr.f32.mxu0 0.0
    %414 = vmatmul.mubr.f32.gmra.mxu0 %v76
    %v415 = vpop.f32.mrf.mxu0
    %v416 = vadd.f32 %v167, %v415
    %v417 = vpop.f32.mrf.mxu0
    %v418 = vadd.f32 %v171, %v417
    %419 = vmatprep.mubr.f32.mxu0 0.0
    %420 = vmatmul.mubr.f32.gmra.mxu0 %v77
    %v421 = vpop.f32.mrf.mxu0
    %v422 = vadd.f32 %v167, %v421
    %v423 = vpop.f32.mrf.mxu0
    %v424 = vadd.f32 %v171, %v423
    %425 = vmatprep.mubr.f32.mxu0 0.0
    %426 = vmatmul.mubr.f32.gmra.mxu0 %v78
    %v427 = vpop.f32.mrf.mxu0
    %v428 = vadd.f32 %v167, %v427
    %v429 = vpop.f32.mrf.mxu0
    %v430 = vadd.f32 %v171, %v429
    %431 = vmatprep.mubr.f32.mxu0 0.0
    %432 = vmatmul.mubr.f32.gmra.mxu0 %v79
    %v433 = vpop.f32.mrf.mxu0
    %v434 = vadd.f32 %v167, %v433
    %v435 = vpop.f32.mrf.mxu0
    %v436 = vadd.f32 %v171, %v435
    %437 = vmatprep.mubr.f32.mxu0 0.0
    %438 = vmatmul.mubr.f32.gmra.mxu0 %v80
    %v439 = vpop.f32.mrf.mxu0
    %v440 = vadd.f32 %v167, %v439
    %v441 = vpop.f32.mrf.mxu0
    %v442 = vadd.f32 %v171, %v441
    %443 = vmatprep.mubr.f32.mxu0 0.0
    %444 = vmatmul.mubr.f32.gmra.mxu0 %v81
    %v445 = vpop.f32.mrf.mxu0
    %v446 = vadd.f32 %v167, %v445
    %v447 = vpop.f32.mrf.mxu0
    %v448 = vadd.f32 %v171, %v447
    %449 = vmatprep.mubr.f32.mxu0 0.0
    %450 = vmatmul.mubr.f32.gmra.mxu0 %v82
    %v451 = vpop.f32.mrf.mxu0
    %v452 = vadd.f32 %v167, %v451
    %v453 = vpop.f32.mrf.mxu0
    %v454 = vadd.f32 %v171, %v453
    %455 = vmatprep.mubr.f32.mxu0 0.0
    %456 = vmatmul.mubr.f32.gmra.mxu0 %v83
    %v457 = vpop.f32.mrf.mxu0
    %v458 = vadd.f32 %v167, %v457
    %v459 = vpop.f32.mrf.mxu0
    %v460 = vadd.f32 %v171, %v459
    %461 = vmatprep.mubr.f32.mxu0 0.0
    %462 = vmatmul.mubr.f32.gmra.mxu0 %v84
    %v463 = vpop.f32.mrf.mxu0
    %v464 = vadd.f32 %v167, %v463
    %v465 = vpop.f32.mrf.mxu0
    %v466 = vadd.f32 %v171, %v465
    %467 = vmatprep.mubr.f32.mxu0 0.0
    %468 = vmatmul.mubr.f32.gmra.mxu0 %v85
    %v469 = vpop.f32.mrf.mxu0
    %v470 = vadd.f32 %v167, %v469
    %v471 = vpop.f32.mrf.mxu0
    %v472 = vadd.f32 %v171, %v471
    %473 = vmatprep.mubr.f32.mxu0 0.0
    %474 = vmatmul.mubr.f32.gmra.mxu0 %v86
    %v475 = vpop.f32.mrf.mxu0
    %v476 = vadd.f32 %v167, %v475
    %v477 = vpop.f32.mrf.mxu0
    %v478 = vadd.f32 %v171, %v477
    %479 = vmatprep.mubr.f32.mxu0 0.0
    %480 = vmatmul.mubr.f32.gmra.mxu0 %v87
    %v481 = vpop.f32.mrf.mxu0
    %v482 = vadd.f32 %v167, %v481
    %v483 = vpop.f32.mrf.mxu0
    %v484 = vadd.f32 %v171, %v483
    %485 = vmatprep.mubr.f32.mxu0 0.0
    %486 = vmatmul.mubr.f32.gmra.mxu0 %v88
    %v487 = vpop.f32.mrf.mxu0
    %v488 = vadd.f32 %v167, %v487
    %v489 = vpop.f32.mrf.mxu0
    %v490 = vadd.f32 %v171, %v489
    %491 = vmatprep.mubr.f32.mxu0 0.0
    %492 = vmatmul.mubr.f32.gmra.mxu0 %v89
    %v493 = vpop.f32.mrf.mxu0
    %v494 = vadd.f32 %v167, %v493
    %v495 = vpop.f32.mrf.mxu0
    %v496 = vadd.f32 %v171, %v495
    %497 = vdwg.mxu0
    %v498 = vmul.f32 %v243, 0.5
    %v499 = vmul.f32 %v245, 0.5
    %v500 = vmul.f32 %v404, 0.5
    %v501 = vmul.f32 %v406, 0.5
    %v502 = vmul.f32 %v249, 0.5
    %v503 = vmul.f32 %v251, 0.5
    %v504 = vmul.f32 %v410, 0.5
    %v505 = vmul.f32 %v412, 0.5
    %v506 = vmul.f32 %v255, 0.5
    %v507 = vmul.f32 %v257, 0.5
    %v508 = vmul.f32 %v416, 0.5
    %v509 = vmul.f32 %v418, 0.5
    %v510 = vmul.f32 %v261, 0.5
    %v511 = vmul.f32 %v263, 0.5
    %v512 = vmul.f32 %v422, 0.5
    %v513 = vmul.f32 %v424, 0.5
    %v514 = vmul.f32 %v267, 0.5
    %v515 = vmul.f32 %v269, 0.5
    %v516 = vmul.f32 %v428, 0.5
    %v517 = vmul.f32 %v430, 0.5
    %v518 = vmul.f32 %v273, 0.5
    %v519 = vmul.f32 %v275, 0.5
    %v520 = vmul.f32 %v434, 0.5
    %v521 = vmul.f32 %v436, 0.5
    %v522 = vmul.f32 %v279, 0.5
    %v523 = vmul.f32 %v281, 0.5
    %v524 = vmul.f32 %v440, 0.5
    %v525 = vmul.f32 %v442, 0.5
    %v526 = vmul.f32 %v285, 0.5
    %v527 = vmul.f32 %v287, 0.5
    %v528 = vmul.f32 %v446, 0.5
    %v529 = vmul.f32 %v448, 0.5
    %v530 = vmul.f32 %v291, 0.5
    %v531 = vmul.f32 %v293, 0.5
    %v532 = vmul.f32 %v452, 0.5
    %v533 = vmul.f32 %v454, 0.5
    %v534 = vmul.f32 %v297, 0.5
    %v535 = vmul.f32 %v299, 0.5
    %v536 = vmul.f32 %v458, 0.5
    %v537 = vmul.f32 %v460, 0.5
    %v538 = vmul.f32 %v303, 0.5
    %v539 = vmul.f32 %v305, 0.5
    %v540 = vmul.f32 %v464, 0.5
    %v541 = vmul.f32 %v466, 0.5
    %v542 = vmul.f32 %v309, 0.5
    %v543 = vmul.f32 %v311, 0.5
    %v544 = vmul.f32 %v470, 0.5
    %v545 = vmul.f32 %v472, 0.5
    %v546 = vmul.f32 %v315, 0.5
    %v547 = vmul.f32 %v317, 0.5
    %v548 = vmul.f32 %v476, 0.5
    %v549 = vmul.f32 %v478, 0.5
    %v550 = vmul.f32 %v321, 0.5
    %v551 = vmul.f32 %v323, 0.5
    %v552 = vmul.f32 %v482, 0.5
    %v553 = vmul.f32 %v484, 0.5
    %v554 = vmul.f32 %v327, 0.5
    %v555 = vmul.f32 %v329, 0.5
    %v556 = vmul.f32 %v488, 0.5
    %v557 = vmul.f32 %v490, 0.5
    %v558 = vmul.f32 %v333, 0.5
    %v559 = vmul.f32 %v335, 0.5
    %v560 = vmul.f32 %v494, 0.5
    %v561 = vmul.f32 %v496, 0.5
    %v562 = vmul.f32 %v243, %v243
    %v563 = vmul.f32 %v245, %v245
    %v564 = vmul.f32 %v404, %v404
    %v565 = vmul.f32 %v406, %v406
    %v566 = vmul.f32 %v249, %v249
    %v567 = vmul.f32 %v251, %v251
    %v568 = vmul.f32 %v410, %v410
    %v569 = vmul.f32 %v412, %v412
    %v570 = vmul.f32 %v255, %v255
    %v571 = vmul.f32 %v257, %v257
    %v572 = vmul.f32 %v416, %v416
    %v573 = vmul.f32 %v418, %v418
    %v574 = vmul.f32 %v261, %v261
    %v575 = vmul.f32 %v263, %v263
    %v576 = vmul.f32 %v422, %v422
    %v577 = vmul.f32 %v424, %v424
    %v578 = vmul.f32 %v267, %v267
    %v579 = vmul.f32 %v269, %v269
    %v580 = vmul.f32 %v428, %v428
    %v581 = vmul.f32 %v430, %v430
    %v582 = vmul.f32 %v273, %v273
    %v583 = vmul.f32 %v275, %v275
    %v584 = vmul.f32 %v434, %v434
    %v585 = vmul.f32 %v436, %v436
    %v586 = vmul.f32 %v279, %v279
    %v587 = vmul.f32 %v281, %v281
    %v588 = vmul.f32 %v440, %v440
    %v589 = vmul.f32 %v442, %v442
    %v590 = vmul.f32 %v285, %v285
    %v591 = vmul.f32 %v287, %v287
    %v592 = vmul.f32 %v446, %v446
    %v593 = vmul.f32 %v448, %v448
    %v594 = vmul.f32 %v291, %v291
    %v595 = vmul.f32 %v293, %v293
    %v596 = vmul.f32 %v452, %v452
    %v597 = vmul.f32 %v454, %v454
    %v598 = vmul.f32 %v297, %v297
    %v599 = vmul.f32 %v299, %v299
    %v600 = vmul.f32 %v458, %v458
    %v601 = vmul.f32 %v460, %v460
    %v602 = vmul.f32 %v303, %v303
    %v603 = vmul.f32 %v305, %v305
    %v604 = vmul.f32 %v464, %v464
    %v605 = vmul.f32 %v466, %v466
    %v606 = vmul.f32 %v309, %v309
    %v607 = vmul.f32 %v311, %v311
    %v608 = vmul.f32 %v470, %v470
    %v609 = vmul.f32 %v472, %v472
    %v610 = vmul.f32 %v315, %v315
    %v611 = vmul.f32 %v317, %v317
    %v612 = vmul.f32 %v476, %v476
    %v613 = vmul.f32 %v478, %v478
    %v614 = vmul.f32 %v321, %v321
    %v615 = vmul.f32 %v323, %v323
    %v616 = vmul.f32 %v482, %v482
    %v617 = vmul.f32 %v484, %v484
    %v618 = vmul.f32 %v327, %v327
    %v619 = vmul.f32 %v329, %v329
    %v620 = vmul.f32 %v488, %v488
    %v621 = vmul.f32 %v490, %v490
    %v622 = vmul.f32 %v333, %v333
    %v623 = vmul.f32 %v335, %v335
    %v624 = vmul.f32 %v494, %v494
    %v625 = vmul.f32 %v496, %v496
    %v626 = vmul.f32 %v562, %v243
    %v627 = vmul.f32 %v563, %v245
    %v628 = vmul.f32 %v564, %v404
    %v629 = vmul.f32 %v565, %v406
    %v630 = vmul.f32 %v566, %v249
    %v631 = vmul.f32 %v567, %v251
    %v632 = vmul.f32 %v568, %v410
    %v633 = vmul.f32 %v569, %v412
    %v634 = vmul.f32 %v570, %v255
    %v635 = vmul.f32 %v571, %v257
    %v636 = vmul.f32 %v572, %v416
    %v637 = vmul.f32 %v573, %v418
    %v638 = vmul.f32 %v574, %v261
    %v639 = vmul.f32 %v575, %v263
    %v640 = vmul.f32 %v576, %v422
    %v641 = vmul.f32 %v577, %v424
    %v642 = vmul.f32 %v578, %v267
    %v643 = vmul.f32 %v579, %v269
    %v644 = vmul.f32 %v580, %v428
    %v645 = vmul.f32 %v581, %v430
    %v646 = vmul.f32 %v582, %v273
    %v647 = vmul.f32 %v583, %v275
    %v648 = vmul.f32 %v584, %v434
    %v649 = vmul.f32 %v585, %v436
    %v650 = vmul.f32 %v586, %v279
    %v651 = vmul.f32 %v587, %v281
    %v652 = vmul.f32 %v588, %v440
    %v653 = vmul.f32 %v589, %v442
    %v654 = vmul.f32 %v590, %v285
    %v655 = vmul.f32 %v591, %v287
    %v656 = vmul.f32 %v592, %v446
    %v657 = vmul.f32 %v593, %v448
    %v658 = vmul.f32 %v594, %v291
    %v659 = vmul.f32 %v595, %v293
    %v660 = vmul.f32 %v596, %v452
    %v661 = vmul.f32 %v597, %v454
    %v662 = vmul.f32 %v598, %v297
    %v663 = vmul.f32 %v599, %v299
    %v664 = vmul.f32 %v600, %v458
    %v665 = vmul.f32 %v601, %v460
    %v666 = vmul.f32 %v602, %v303
    %v667 = vmul.f32 %v603, %v305
    %v668 = vmul.f32 %v604, %v464
    %v669 = vmul.f32 %v605, %v466
    %v670 = vmul.f32 %v606, %v309
    %v671 = vmul.f32 %v607, %v311
    %v672 = vmul.f32 %v608, %v470
    %v673 = vmul.f32 %v609, %v472
    %v674 = vmul.f32 %v610, %v315
    %v675 = vmul.f32 %v611, %v317
    %v676 = vmul.f32 %v612, %v476
    %v677 = vmul.f32 %v613, %v478
    %v678 = vmul.f32 %v614, %v321
    %v679 = vmul.f32 %v615, %v323
    %v680 = vmul.f32 %v616, %v482
    %v681 = vmul.f32 %v617, %v484
    %v682 = vmul.f32 %v618, %v327
    %v683 = vmul.f32 %v619, %v329
    %v684 = vmul.f32 %v620, %v488
    %v685 = vmul.f32 %v621, %v490
    %v686 = vmul.f32 %v622, %v333
    %v687 = vmul.f32 %v623, %v335
    %v688 = vmul.f32 %v624, %v494
    %v689 = vmul.f32 %v625, %v496
    %v690 = vmul.f32 %v626, 0.044715
    %v691 = vmul.f32 %v627, 0.044715
    %v692 = vmul.f32 %v628, 0.044715
    %v693 = vmul.f32 %v629, 0.044715
    %v694 = vmul.f32 %v630, 0.044715
    %v695 = vmul.f32 %v631, 0.044715
    %v696 = vmul.f32 %v632, 0.044715
    %v697 = vmul.f32 %v633, 0.044715
    %v698 = vmul.f32 %v634, 0.044715
    %v699 = vmul.f32 %v635, 0.044715
    %v700 = vmul.f32 %v636, 0.044715
    %v701 = vmul.f32 %v637, 0.044715
    %v702 = vmul.f32 %v638, 0.044715
    %v703 = vmul.f32 %v639, 0.044715
    %v704 = vmul.f32 %v640, 0.044715
    %v705 = vmul.f32 %v641, 0.044715
    %v706 = vmul.f32 %v642, 0.044715
    %v707 = vmul.f32 %v643, 0.044715
    %v708 = vmul.f32 %v644, 0.044715
    %v709 = vmul.f32 %v645, 0.044715
    %v710 = vmul.f32 %v646, 0.044715
    %v711 = vmul.f32 %v647, 0.044715
    %v712 = vmul.f32 %v648, 0.044715
    %v713 = vmul.f32 %v649, 0.044715
    %v714 = vmul.f32 %v650, 0.044715
    %v715 = vmul.f32 %v651, 0.044715
    %v716 = vmul.f32 %v652, 0.044715
    %v717 = vmul.f32 %v653, 0.044715
    %v718 = vmul.f32 %v654, 0.044715
    %v719 = vmul.f32 %v655, 0.044715
    %v720 = vmul.f32 %v656, 0.044715
    %v721 = vmul.f32 %v657, 0.044715
    %v722 = vmul.f32 %v658, 0.044715
    %v723 = vmul.f32 %v659, 0.044715
    %v724 = vmul.f32 %v660, 0.044715
    %v725 = vmul.f32 %v661, 0.044715
    %v726 = vmul.f32 %v662, 0.044715
    %v727 = vmul.f32 %v663, 0.044715
    %v728 = vmul.f32 %v664, 0.044715
    %v729 = vmul.f32 %v665, 0.044715
    %v730 = vmul.f32 %v666, 0.044715
    %v731 = vmul.f32 %v667, 0.044715
    %v732 = vmul.f32 %v668, 0.044715
    %v733 = vmul.f32 %v669, 0.044715
    %v734 = vmul.f32 %v670, 0.044715
    %v735 = vmul.f32 %v671, 0.044715
    %v736 = vmul.f32 %v672, 0.044715
    %v737 = vmul.f32 %v673, 0.044715
    %v738 = vmul.f32 %v674, 0.044715
    %v739 = vmul.f32 %v675, 0.044715
    %v740 = vmul.f32 %v676, 0.044715
    %v741 = vmul.f32 %v677, 0.044715
    %v742 = vmul.f32 %v678, 0.044715
    %v743 = vmul.f32 %v679, 0.044715
    %v744 = vmul.f32 %v680, 0.044715
    %v745 = vmul.f32 %v681, 0.044715
    %v746 = vmul.f32 %v682, 0.044715
    %v747 = vmul.f32 %v683, 0.044715
    %v748 = vmul.f32 %v684, 0.044715
    %v749 = vmul.f32 %v685, 0.044715
    %v750 = vmul.f32 %v686, 0.044715
    %v751 = vmul.f32 %v687, 0.044715
    %v752 = vmul.f32 %v688, 0.044715
    %v753 = vmul.f32 %v689, 0.044715
    %v754 = vadd.f32 %v243, %v690
    %v755 = vadd.f32 %v245, %v691
    %v756 = vadd.f32 %v404, %v692
    %v757 = vadd.f32 %v406, %v693
    %v758 = vadd.f32 %v249, %v694
    %v759 = vadd.f32 %v251, %v695
    %v760 = vadd.f32 %v410, %v696
    %v761 = vadd.f32 %v412, %v697
    %v762 = vadd.f32 %v255, %v698
    %v763 = vadd.f32 %v257, %v699
    %v764 = vadd.f32 %v416, %v700
    %v765 = vadd.f32 %v418, %v701
    %v766 = vadd.f32 %v261, %v702
    %v767 = vadd.f32 %v263, %v703
    %v768 = vadd.f32 %v422, %v704
    %v769 = vadd.f32 %v424, %v705
    %v770 = vadd.f32 %v267, %v706
    %v771 = vadd.f32 %v269, %v707
    %v772 = vadd.f32 %v428, %v708
    %v773 = vadd.f32 %v430, %v709
    %v774 = vadd.f32 %v273, %v710
    %v775 = vadd.f32 %v275, %v711
    %v776 = vadd.f32 %v434, %v712
    %v777 = vadd.f32 %v436, %v713
    %v778 = vadd.f32 %v279, %v714
    %v779 = vadd.f32 %v281, %v715
    %v780 = vadd.f32 %v440, %v716
    %v781 = vadd.f32 %v442, %v717
    %v782 = vadd.f32 %v285, %v718
    %v783 = vadd.f32 %v287, %v719
    %v784 = vadd.f32 %v446, %v720
    %v785 = vadd.f32 %v448, %v721
    %v786 = vadd.f32 %v291, %v722
    %v787 = vadd.f32 %v293, %v723
    %v788 = vadd.f32 %v452, %v724
    %v789 = vadd.f32 %v454, %v725
    %v790 = vadd.f32 %v297, %v726
    %v791 = vadd.f32 %v299, %v727
    %v792 = vadd.f32 %v458, %v728
    %v793 = vadd.f32 %v460, %v729
    %v794 = vadd.f32 %v303, %v730
    %v795 = vadd.f32 %v305, %v731
    %v796 = vadd.f32 %v464, %v732
    %v797 = vadd.f32 %v466, %v733
    %v798 = vadd.f32 %v309, %v734
    %v799 = vadd.f32 %v311, %v735
    %v800 = vadd.f32 %v470, %v736
    %v801 = vadd.f32 %v472, %v737
    %v802 = vadd.f32 %v315, %v738
    %v803 = vadd.f32 %v317, %v739
    %v804 = vadd.f32 %v476, %v740
    %v805 = vadd.f32 %v478, %v741
    %v806 = vadd.f32 %v321, %v742
    %v807 = vadd.f32 %v323, %v743
    %v808 = vadd.f32 %v482, %v744
    %v809 = vadd.f32 %v484, %v745
    %v810 = vadd.f32 %v327, %v746
    %v811 = vadd.f32 %v329, %v747
    %v812 = vadd.f32 %v488, %v748
    %v813 = vadd.f32 %v490, %v749
    %v814 = vadd.f32 %v333, %v750
    %v815 = vadd.f32 %v335, %v751
    %v816 = vadd.f32 %v494, %v752
    %v817 = vadd.f32 %v496, %v753
    %v818 = vmul.f32 %v754, 0.7978846
    %v819 = vmul.f32 %v755, 0.7978846
    %v820 = vmul.f32 %v756, 0.7978846
    %v821 = vmul.f32 %v757, 0.7978846
    %v822 = vmul.f32 %v758, 0.7978846
    %v823 = vmul.f32 %v759, 0.7978846
    %v824 = vmul.f32 %v760, 0.7978846
    %v825 = vmul.f32 %v761, 0.7978846
    %v826 = vmul.f32 %v762, 0.7978846
    %v827 = vmul.f32 %v763, 0.7978846
    %v828 = vmul.f32 %v764, 0.7978846
    %v829 = vmul.f32 %v765, 0.7978846
    %v830 = vmul.f32 %v766, 0.7978846
    %v831 = vmul.f32 %v767, 0.7978846
    %v832 = vmul.f32 %v768, 0.7978846
    %v833 = vmul.f32 %v769, 0.7978846
    %v834 = vmul.f32 %v770, 0.7978846
    %v835 = vmul.f32 %v771, 0.7978846
    %v836 = vmul.f32 %v772, 0.7978846
    %v837 = vmul.f32 %v773, 0.7978846
    %v838 = vmul.f32 %v774, 0.7978846
    %v839 = vmul.f32 %v775, 0.7978846
    %v840 = vmul.f32 %v776, 0.7978846
    %v841 = vmul.f32 %v777, 0.7978846
    %v842 = vmul.f32 %v778, 0.7978846
    %v843 = vmul.f32 %v779, 0.7978846
    %v844 = vmul.f32 %v780, 0.7978846
    %v845 = vmul.f32 %v781, 0.7978846
    %v846 = vmul.f32 %v782, 0.7978846
    %v847 = vmul.f32 %v783, 0.7978846
    %v848 = vmul.f32 %v784, 0.7978846
    %v849 = vmul.f32 %v785, 0.7978846
    %v850 = vmul.f32 %v786, 0.7978846
    %v851 = vmul.f32 %v787, 0.7978846
    %v852 = vmul.f32 %v788, 0.7978846
    %v853 = vmul.f32 %v789, 0.7978846
    %v854 = vmul.f32 %v790, 0.7978846
    %v855 = vmul.f32 %v791, 0.7978846
    %v856 = vmul.f32 %v792, 0.7978846
    %v857 = vmul.f32 %v793, 0.7978846
    %v858 = vmul.f32 %v794, 0.7978846
    %v859 = vmul.f32 %v795, 0.7978846
    %v860 = vmul.f32 %v796, 0.7978846
    %v861 = vmul.f32 %v797, 0.7978846
    %v862 = vmul.f32 %v798, 0.7978846
    %v863 = vmul.f32 %v799, 0.7978846
    %v864 = vmul.f32 %v800, 0.7978846
    %v865 = vmul.f32 %v801, 0.7978846
    %v866 = vmul.f32 %v802, 0.7978846
    %v867 = vmul.f32 %v803, 0.7978846
    %v868 = vmul.f32 %v804, 0.7978846
    %v869 = vmul.f32 %v805, 0.7978846
    %v870 = vmul.f32 %v806, 0.7978846
    %v871 = vmul.f32 %v807, 0.7978846
    %v872 = vmul.f32 %v808, 0.7978846
    %v873 = vmul.f32 %v809, 0.7978846
    %v874 = vmul.f32 %v810, 0.7978846
    %v875 = vmul.f32 %v811, 0.7978846
    %v876 = vmul.f32 %v812, 0.7978846
    %v877 = vmul.f32 %v813, 0.7978846
    %v878 = vmul.f32 %v814, 0.7978846
    %v879 = vmul.f32 %v815, 0.7978846
    %v880 = vmul.f32 %v816, 0.7978846
    %v881 = vmul.f32 %v817, 0.7978846
    %v882 = vtanh.pop %v818
    %v883 = vtanh.pop %v819
    %v884 = vtanh.pop %v820
    %v885 = vtanh.pop %v821
    %v886 = vtanh.pop %v822
    %v887 = vtanh.pop %v823
    %v888 = vtanh.pop %v824
    %v889 = vtanh.pop %v825
    %v890 = vtanh.pop %v826
    %v891 = vtanh.pop %v827
    %v892 = vtanh.pop %v828
    %v893 = vtanh.pop %v829
    %v894 = vtanh.pop %v830
    %v895 = vtanh.pop %v831
    %v896 = vtanh.pop %v832
    %v897 = vtanh.pop %v833
    %v898 = vtanh.pop %v834
    %v899 = vtanh.pop %v835
    %v900 = vtanh.pop %v836
    %v901 = vtanh.pop %v837
    %v902 = vtanh.pop %v838
    %v903 = vtanh.pop %v839
    %v904 = vtanh.pop %v840
    %v905 = vtanh.pop %v841
    %v906 = vtanh.pop %v842
    %v907 = vtanh.pop %v843
    %v908 = vtanh.pop %v844
    %v909 = vtanh.pop %v845
    %v910 = vtanh.pop %v846
    %v911 = vtanh.pop %v847
    %v912 = vtanh.pop %v848
    %v913 = vtanh.pop %v849
    %v914 = vtanh.pop %v850
    %v915 = vtanh.pop %v851
    %v916 = vtanh.pop %v852
    %v917 = vtanh.pop %v853
    %v918 = vtanh.pop %v854
    %v919 = vtanh.pop %v855
    %v920 = vtanh.pop %v856
    %v921 = vtanh.pop %v857
    %v922 = vtanh.pop %v858
    %v923 = vtanh.pop %v859
    %v924 = vtanh.pop %v860
    %v925 = vtanh.pop %v861
    %v926 = vtanh.pop %v862
    %v927 = vtanh.pop %v863
    %v928 = vtanh.pop %v864
    %v929 = vtanh.pop %v865
    %v930 = vtanh.pop %v866
    %v931 = vtanh.pop %v867
    %v932 = vtanh.pop %v868
    %v933 = vtanh.pop %v869
    %v934 = vtanh.pop %v870
    %v935 = vtanh.pop %v871
    %v936 = vtanh.pop %v872
    %v937 = vtanh.pop %v873
    %v938 = vtanh.pop %v874
    %v939 = vtanh.pop %v875
    %v940 = vtanh.pop %v876
    %v941 = vtanh.pop %v877
    %v942 = vtanh.pop %v878
    %v943 = vtanh.pop %v879
    %v944 = vtanh.pop %v880
    %v945 = vtanh.pop %v881
    %v946 = vadd.f32 %v882, 1.0
    %v947 = vadd.f32 %v883, 1.0
    %v948 = vadd.f32 %v884, 1.0
    %v949 = vadd.f32 %v885, 1.0
    %v950 = vadd.f32 %v886, 1.0
    %v951 = vadd.f32 %v887, 1.0
    %v952 = vadd.f32 %v888, 1.0
    %v953 = vadd.f32 %v889, 1.0
    %v954 = vadd.f32 %v890, 1.0
    %v955 = vadd.f32 %v891, 1.0
    %v956 = vadd.f32 %v892, 1.0
    %v957 = vadd.f32 %v893, 1.0
    %v958 = vadd.f32 %v894, 1.0
    %v959 = vadd.f32 %v895, 1.0
    %v960 = vadd.f32 %v896, 1.0
    %v961 = vadd.f32 %v897, 1.0
    %v962 = vadd.f32 %v898, 1.0
    %v963 = vadd.f32 %v899, 1.0
    %v964 = vadd.f32 %v900, 1.0
    %v965 = vadd.f32 %v901, 1.0
    %v966 = vadd.f32 %v902, 1.0
    %v967 = vadd.f32 %v903, 1.0
    %v968 = vadd.f32 %v904, 1.0
    %v969 = vadd.f32 %v905, 1.0
    %v970 = vadd.f32 %v906, 1.0
    %v971 = vadd.f32 %v907, 1.0
    %v972 = vadd.f32 %v908, 1.0
    %v973 = vadd.f32 %v909, 1.0
    %v974 = vadd.f32 %v910, 1.0
    %v975 = vadd.f32 %v911, 1.0
    %v976 = vadd.f32 %v912, 1.0
    %v977 = vadd.f32 %v913, 1.0
    %v978 = vadd.f32 %v914, 1.0
    %v979 = vadd.f32 %v915, 1.0
    %v980 = vadd.f32 %v916, 1.0
    %v981 = vadd.f32 %v917, 1.0
    %v982 = vadd.f32 %v918, 1.0
    %v983 = vadd.f32 %v919, 1.0
    %v984 = vadd.f32 %v920, 1.0
    %v985 = vadd.f32 %v921, 1.0
    %v986 = vadd.f32 %v922, 1.0
    %v987 = vadd.f32 %v923, 1.0
    %v988 = vadd.f32 %v924, 1.0
    %v989 = vadd.f32 %v925, 1.0
    %v990 = vadd.f32 %v926, 1.0
    %v991 = vadd.f32 %v927, 1.0
    %v992 = vadd.f32 %v928, 1.0
    %v993 = vadd.f32 %v929, 1.0
    %v994 = vadd.f32 %v930, 1.0
    %v995 = vadd.f32 %v931, 1.0
    %v996 = vadd.f32 %v932, 1.0
    %v997 = vadd.f32 %v933, 1.0
    %v998 = vadd.f32 %v934, 1.0
    %v999 = vadd.f32 %v935, 1.0
    %v1000 = vadd.f32 %v936, 1.0
    %v1001 = vadd.f32 %v937, 1.0
    %v1002 = vadd.f32 %v938, 1.0
    %v1003 = vadd.f32 %v939, 1.0
    %v1004 = vadd.f32 %v940, 1.0
    %v1005 = vadd.f32 %v941, 1.0
    %v1006 = vadd.f32 %v942, 1.0
    %v1007 = vadd.f32 %v943, 1.0
    %v1008 = vadd.f32 %v944, 1.0
    %v1009 = vadd.f32 %v945, 1.0
    %v1010 = vmul.f32 %v498, %v946
    %v1011 = vmul.f32 %v499, %v947
    %v1012 = vmul.f32 %v500, %v948
    %v1013 = vmul.f32 %v501, %v949
    %v1014 = vmul.f32 %v502, %v950
    %v1015 = vmul.f32 %v503, %v951
    %v1016 = vmul.f32 %v504, %v952
    %v1017 = vmul.f32 %v505, %v953
    %v1018 = vmul.f32 %v506, %v954
    %v1019 = vmul.f32 %v507, %v955
    %v1020 = vmul.f32 %v508, %v956
    %v1021 = vmul.f32 %v509, %v957
    %v1022 = vmul.f32 %v510, %v958
    %v1023 = vmul.f32 %v511, %v959
    %v1024 = vmul.f32 %v512, %v960
    %v1025 = vmul.f32 %v513, %v961
    %v1026 = vmul.f32 %v514, %v962
    %v1027 = vmul.f32 %v515, %v963
    %v1028 = vmul.f32 %v516, %v964
    %v1029 = vmul.f32 %v517, %v965
    %v1030 = vmul.f32 %v518, %v966
    %v1031 = vmul.f32 %v519, %v967
    %v1032 = vmul.f32 %v520, %v968
    %v1033 = vmul.f32 %v521, %v969
    %v1034 = vmul.f32 %v522, %v970
    %v1035 = vmul.f32 %v523, %v971
    %v1036 = vmul.f32 %v524, %v972
    %v1037 = vmul.f32 %v525, %v973
    %v1038 = vmul.f32 %v526, %v974
    %v1039 = vmul.f32 %v527, %v975
    %v1040 = vmul.f32 %v528, %v976
    %v1041 = vmul.f32 %v529, %v977
    %v1042 = vmul.f32 %v530, %v978
    %v1043 = vmul.f32 %v531, %v979
    %v1044 = vmul.f32 %v532, %v980
    %v1045 = vmul.f32 %v533, %v981
    %v1046 = vmul.f32 %v534, %v982
    %v1047 = vmul.f32 %v535, %v983
    %v1048 = vmul.f32 %v536, %v984
    %v1049 = vmul.f32 %v537, %v985
    %v1050 = vmul.f32 %v538, %v986
    %v1051 = vmul.f32 %v539, %v987
    %v1052 = vmul.f32 %v540, %v988
    %v1053 = vmul.f32 %v541, %v989
    %v1054 = vmul.f32 %v542, %v990
    %v1055 = vmul.f32 %v543, %v991
    %v1056 = vmul.f32 %v544, %v992
    %v1057 = vmul.f32 %v545, %v993
    %v1058 = vmul.f32 %v546, %v994
    %v1059 = vmul.f32 %v547, %v995
    %v1060 = vmul.f32 %v548, %v996
    %v1061 = vmul.f32 %v549, %v997
    %v1062 = vmul.f32 %v550, %v998
    %v1063 = vmul.f32 %v551, %v999
    %v1064 = vmul.f32 %v552, %v1000
    %v1065 = vmul.f32 %v553, %v1001
    %v1066 = vmul.f32 %v554, %v1002
    %v1067 = vmul.f32 %v555, %v1003
    %v1068 = vmul.f32 %v556, %v1004
    %v1069 = vmul.f32 %v557, %v1005
    %v1070 = vmul.f32 %v558, %v1006
    %v1071 = vmul.f32 %v559, %v1007
    %v1072 = vmul.f32 %v560, %v1008
    %v1073 = vmul.f32 %v561, %v1009
    %v1074 = vld [vmem:[#allocation8] sm:$0xff]
    %v1075 = vld [vmem:[#allocation8 + $0x8] sm:$0xff]
    %v1076 = vld [vmem:[#allocation8 + $0x10] sm:$0xff]
    %v1077 = vld [vmem:[#allocation8 + $0x18] sm:$0xff]
    %v1078 = vld [vmem:[#allocation8 + $0x20] sm:$0xff]
    %v1079 = vld [vmem:[#allocation8 + $0x28] sm:$0xff]
    %v1080 = vld [vmem:[#allocation8 + $0x30] sm:$0xff]
    %v1081 = vld [vmem:[#allocation8 + $0x38] sm:$0xff]
    %v1082 = vld [vmem:[#allocation8 + $0x40] sm:$0xff]
    %v1083 = vld [vmem:[#allocation8 + $0x48] sm:$0xff]
    %v1084 = vld [vmem:[#allocation8 + $0x50] sm:$0xff]
    %v1085 = vld [vmem:[#allocation8 + $0x58] sm:$0xff]
    %v1086 = vld [vmem:[#allocation8 + $0x60] sm:$0xff]
    %v1087 = vld [vmem:[#allocation8 + $0x68] sm:$0xff]
    %v1088 = vld [vmem:[#allocation8 + $0x70] sm:$0xff]
    %v1089 = vld [vmem:[#allocation8 + $0x78] sm:$0xff]
    %v1090 = vld [vmem:[#allocation8 + $0x80] sm:$0xff]
    %v1091 = vld [vmem:[#allocation8 + $0x88] sm:$0xff]
    %v1092 = vld [vmem:[#allocation8 + $0x90] sm:$0xff]
    %v1093 = vld [vmem:[#allocation8 + $0x98] sm:$0xff]
    %v1094 = vld [vmem:[#allocation8 + $0xa0] sm:$0xff]
    %v1095 = vld [vmem:[#allocation8 + $0xa8] sm:$0xff]
    %v1096 = vld [vmem:[#allocation8 + $0xb0] sm:$0xff]
    %v1097 = vld [vmem:[#allocation8 + $0xb8] sm:$0xff]
    %v1098 = vld [vmem:[#allocation8 + $0xc0] sm:$0xff]
    %v1099 = vld [vmem:[#allocation8 + $0xc8] sm:$0xff]
    %v1100 = vld [vmem:[#allocation8 + $0xd0] sm:$0xff]
    %v1101 = vld [vmem:[#allocation8 + $0xd8] sm:$0xff]
    %v1102 = vld [vmem:[#allocation8 + $0xe0] sm:$0xff]
    %v1103 = vld [vmem:[#allocation8 + $0xe8] sm:$0xff]
    %v1104 = vld [vmem:[#allocation8 + $0xf0] sm:$0xff]
    %v1105 = vld [vmem:[#allocation8 + $0xf8] sm:$0xff]
    %v1106 = vld [vmem:[#allocation8 + $0x100] sm:$0xff]
    %v1107 = vld [vmem:[#allocation8 + $0x108] sm:$0xff]
    %v1108 = vld [vmem:[#allocation8 + $0x110] sm:$0xff]
    %v1109 = vld [vmem:[#allocation8 + $0x118] sm:$0xff]
    %v1110 = vld [vmem:[#allocation8 + $0x120] sm:$0xff]
    %v1111 = vld [vmem:[#allocation8 + $0x128] sm:$0xff]
    %v1112 = vld [vmem:[#allocation8 + $0x130] sm:$0xff]
    %v1113 = vld [vmem:[#allocation8 + $0x138] sm:$0xff]
    %v1114 = vld [vmem:[#allocation8 + $0x140] sm:$0xff]
    %v1115 = vld [vmem:[#allocation8 + $0x148] sm:$0xff]
    %v1116 = vld [vmem:[#allocation8 + $0x150] sm:$0xff]
    %v1117 = vld [vmem:[#allocation8 + $0x158] sm:$0xff]
    %v1118 = vld [vmem:[#allocation8 + $0x160] sm:$0xff]
    %v1119 = vld [vmem:[#allocation8 + $0x168] sm:$0xff]
    %v1120 = vld [vmem:[#allocation8 + $0x170] sm:$0xff]
    %v1121 = vld [vmem:[#allocation8 + $0x178] sm:$0xff]
    %v1122 = vld [vmem:[#allocation8 + $0x180] sm:$0xff]
    %v1123 = vld [vmem:[#allocation8 + $0x188] sm:$0xff]
    %v1124 = vld [vmem:[#allocation8 + $0x190] sm:$0xff]
    %v1125 = vld [vmem:[#allocation8 + $0x198] sm:$0xff]
    %v1126 = vld [vmem:[#allocation8 + $0x1a0] sm:$0xff]
    %v1127 = vld [vmem:[#allocation8 + $0x1a8] sm:$0xff]
    %v1128 = vld [vmem:[#allocation8 + $0x1b0] sm:$0xff]
    %v1129 = vld [vmem:[#allocation8 + $0x1b8] sm:$0xff]
    %v1130 = vld [vmem:[#allocation8 + $0x1c0] sm:$0xff]
    %v1131 = vld [vmem:[#allocation8 + $0x1c8] sm:$0xff]
    %v1132 = vld [vmem:[#allocation8 + $0x1d0] sm:$0xff]
    %v1133 = vld [vmem:[#allocation8 + $0x1d8] sm:$0xff]
    %v1134 = vld [vmem:[#allocation8 + $0x1e0] sm:$0xff]
    %v1135 = vld [vmem:[#allocation8 + $0x1e8] sm:$0xff]
    %v1136 = vld [vmem:[#allocation8 + $0x1f0] sm:$0xff]
    %v1137 = vld [vmem:[#allocation8 + $0x1f8] sm:$0xff]
    %v1138 = vld [vmem:[%s4] sm:$0x1]
    %v1140 = vlaneseq
    %v1141 = vshrl.u32 %v1140, 7
    %v1142 = vsub.s32 0, %v1141
    %v1143 = vrot.slane %v1138, %v1142
    %1145 = vmatprep.subr.mxu0 0.0
    %1146 = vmatpush1.msra.mxu0 %v1089
    %1147 = vmatprep.subr.mxu0 0.0
    %1148 = vmatpush1.msra.mxu0 %v1088
    %1149 = vmatprep.subr.mxu0 0.0
    %1150 = vmatpush1.msra.mxu0 %v1087
    %1151 = vmatprep.subr.mxu0 0.0
    %1152 = vmatpush1.msra.mxu0 %v1086
    %1153 = vmatprep.subr.mxu0 0.0
    %1154 = vmatpush1.msra.mxu0 %v1085
    %1155 = vmatprep.subr.mxu0 0.0
    %1156 = vmatpush1.msra.mxu0 %v1084
    %1157 = vmatprep.subr.mxu0 0.0
    %1158 = vmatpush1.msra.mxu0 %v1083
    %1159 = vmatprep.subr.mxu0 0.0
    %1160 = vmatpush1.msra.mxu0 %v1082
    %1161 = vmatprep.subr.mxu0 0.0
    %1162 = vmatpush1.msra.mxu0 %v1081
    %1163 = vmatprep.subr.mxu0 0.0
    %1164 = vmatpush1.msra.mxu0 %v1080
    %1165 = vmatprep.subr.mxu0 0.0
    %1166 = vmatpush1.msra.mxu0 %v1079
    %1167 = vmatprep.subr.mxu0 0.0
    %1168 = vmatpush1.msra.mxu0 %v1078
    %1169 = vmatprep.subr.mxu0 0.0
    %1170 = vmatpush1.msra.mxu0 %v1077
    %1171 = vmatprep.subr.mxu0 0.0
    %1172 = vmatpush1.msra.mxu0 %v1076
    %1173 = vmatprep.subr.mxu0 0.0
    %1174 = vmatpush1.msra.mxu0 %v1075
    %1175 = vmatprep.subr.mxu0 0.0
    %1176 = vmatpush1.msra.mxu0 %v1074
    %1177 = vmatprep.subr.mxu0 0.0
    %1178 = vmatpush2.msra.mxu0 %v1105
    %1179 = vmatprep.subr.mxu0 0.0
    %1180 = vmatpush2.msra.mxu0 %v1104
    %1181 = vmatprep.subr.mxu0 0.0
    %1182 = vmatpush2.msra.mxu0 %v1103
    %1183 = vmatprep.subr.mxu0 0.0
    %1184 = vmatpush2.msra.mxu0 %v1102
    %1185 = vmatprep.subr.mxu0 0.0
    %1186 = vmatpush2.msra.mxu0 %v1101
    %1187 = vmatprep.subr.mxu0 0.0
    %1188 = vmatpush2.msra.mxu0 %v1100
    %1189 = vmatprep.subr.mxu0 0.0
    %1190 = vmatpush2.msra.mxu0 %v1099
    %1191 = vmatprep.subr.mxu0 0.0
    %1192 = vmatpush2.msra.mxu0 %v1098
    %1193 = vmatprep.subr.mxu0 0.0
    %1194 = vmatpush2.msra.mxu0 %v1097
    %1195 = vmatprep.subr.mxu0 0.0
    %1196 = vmatpush2.msra.mxu0 %v1096
    %1197 = vmatprep.subr.mxu0 0.0
    %1198 = vmatpush2.msra.mxu0 %v1095
    %1199 = vmatprep.subr.mxu0 0.0
    %1200 = vmatpush2.msra.mxu0 %v1094
    %1201 = vmatprep.subr.mxu0 0.0
    %1202 = vmatpush2.msra.mxu0 %v1093
    %1203 = vmatprep.subr.mxu0 0.0
    %1204 = vmatpush2.msra.mxu0 %v1092
    %1205 = vmatprep.subr.mxu0 0.0
    %1206 = vmatpush2.msra.mxu0 %v1091
    %1207 = vmatprep.subr.mxu0 0.0
    %1208 = vmatpush2.msra.mxu0 %v1090
    %1209 = vmatprep.mubr.f32.mxu0 %v1011
    %1210 = vmatmul.mubr.f32.gmra.mxu0 %v1010
    %v1211 = vpop.f32.mrf.mxu0
    %v1212 = vadd.f32 %v1143, %v1211
    %v1213 = vpop.f32.mrf.mxu0
    %1214 = vmatprep.mubr.f32.mxu0 %v1015
    %1215 = vmatmul.mubr.f32.gmra.mxu0 %v1014
    %v1216 = vpop.f32.mrf.mxu0
    %v1217 = vadd.f32 %v1143, %v1216
    %v1218 = vpop.f32.mrf.mxu0
    %1219 = vmatprep.mubr.f32.mxu0 %v1019
    %1220 = vmatmul.mubr.f32.gmra.mxu0 %v1018
    %v1221 = vpop.f32.mrf.mxu0
    %v1222 = vadd.f32 %v1143, %v1221
    %v1223 = vpop.f32.mrf.mxu0
    %1224 = vmatprep.mubr.f32.mxu0 %v1023
    %1225 = vmatmul.mubr.f32.gmra.mxu0 %v1022
    %v1226 = vpop.f32.mrf.mxu0
    %v1227 = vadd.f32 %v1143, %v1226
    %v1228 = vpop.f32.mrf.mxu0
    %1229 = vmatprep.mubr.f32.mxu0 %v1027
    %1230 = vmatmul.mubr.f32.gmra.mxu0 %v1026
    %v1231 = vpop.f32.mrf.mxu0
    %v1232 = vadd.f32 %v1143, %v1231
    %v1233 = vpop.f32.mrf.mxu0
    %1234 = vmatprep.mubr.f32.mxu0 %v1031
    %1235 = vmatmul.mubr.f32.gmra.mxu0 %v1030
    %v1236 = vpop.f32.mrf.mxu0
    %v1237 = vadd.f32 %v1143, %v1236
    %v1238 = vpop.f32.mrf.mxu0
    %1239 = vmatprep.mubr.f32.mxu0 %v1035
    %1240 = vmatmul.mubr.f32.gmra.mxu0 %v1034
    %v1241 = vpop.f32.mrf.mxu0
    %v1242 = vadd.f32 %v1143, %v1241
    %v1243 = vpop.f32.mrf.mxu0
    %1244 = vmatprep.mubr.f32.mxu0 %v1039
    %1245 = vmatmul.mubr.f32.gmra.mxu0 %v1038
    %v1246 = vpop.f32.mrf.mxu0
    %v1247 = vadd.f32 %v1143, %v1246
    %v1248 = vpop.f32.mrf.mxu0
    %1249 = vmatprep.mubr.f32.mxu0 %v1043
    %1250 = vmatmul.mubr.f32.gmra.mxu0 %v1042
    %v1251 = vpop.f32.mrf.mxu0
    %v1252 = vadd.f32 %v1143, %v1251
    %v1253 = vpop.f32.mrf.mxu0
    %1254 = vmatprep.mubr.f32.mxu0 %v1047
    %1255 = vmatmul.mubr.f32.gmra.mxu0 %v1046
    %v1256 = vpop.f32.mrf.mxu0
    %v1257 = vadd.f32 %v1143, %v1256
    %v1258 = vpop.f32.mrf.mxu0
    %1259 = vmatprep.mubr.f32.mxu0 %v1051
    %1260 = vmatmul.mubr.f32.gmra.mxu0 %v1050
    %v1261 = vpop.f32.mrf.mxu0
    %v1262 = vadd.f32 %v1143, %v1261
    %v1263 = vpop.f32.mrf.mxu0
    %1264 = vmatprep.mubr.f32.mxu0 %v1055
    %1265 = vmatmul.mubr.f32.gmra.mxu0 %v1054
    %v1266 = vpop.f32.mrf.mxu0
    %v1267 = vadd.f32 %v1143, %v1266
    %v1268 = vpop.f32.mrf.mxu0
    %1269 = vmatprep.mubr.f32.mxu0 %v1059
    %1270 = vmatmul.mubr.f32.gmra.mxu0 %v1058
    %v1271 = vpop.f32.mrf.mxu0
    %v1272 = vadd.f32 %v1143, %v1271
    %v1273 = vpop.f32.mrf.mxu0
    %1274 = vmatprep.mubr.f32.mxu0 %v1063
    %1275 = vmatmul.mubr.f32.gmra.mxu0 %v1062
    %v1276 = vpop.f32.mrf.mxu0
    %v1277 = vadd.f32 %v1143, %v1276
    %v1278 = vpop.f32.mrf.mxu0
    %1279 = vmatprep.mubr.f32.mxu0 %v1067
    %1280 = vmatmul.mubr.f32.gmra.mxu0 %v1066
    %v1281 = vpop.f32.mrf.mxu0
    %v1282 = vadd.f32 %v1143, %v1281
    %v1283 = vpop.f32.mrf.mxu0
    %1284 = vmatprep.mubr.f32.mxu0 %v1071
    %1285 = vmatmul.mubr.f32.gmra.mxu0 %v1070
    %v1286 = vpop.f32.mrf.mxu0
    %v1287 = vadd.f32 %v1143, %v1286
    %v1288 = vpop.f32.mrf.mxu0
    %1289 = vdwg.mxu0
    %1290 = vmatprep.subr.mxu0 0.0
    %1291 = vmatpush1.msra.mxu0 %v1121
    %1292 = vmatprep.subr.mxu0 0.0
    %1293 = vmatpush1.msra.mxu0 %v1120
    %1294 = vmatprep.subr.mxu0 0.0
    %1295 = vmatpush1.msra.mxu0 %v1119
    %1296 = vmatprep.subr.mxu0 0.0
    %1297 = vmatpush1.msra.mxu0 %v1118
    %1298 = vmatprep.subr.mxu0 0.0
    %1299 = vmatpush1.msra.mxu0 %v1117
    %1300 = vmatprep.subr.mxu0 0.0
    %1301 = vmatpush1.msra.mxu0 %v1116
    %1302 = vmatprep.subr.mxu0 0.0
    %1303 = vmatpush1.msra.mxu0 %v1115
    %1304 = vmatprep.subr.mxu0 0.0
    %1305 = vmatpush1.msra.mxu0 %v1114
    %1306 = vmatprep.subr.mxu0 0.0
    %1307 = vmatpush1.msra.mxu0 %v1113
    %1308 = vmatprep.subr.mxu0 0.0
    %1309 = vmatpush1.msra.mxu0 %v1112
    %1310 = vmatprep.subr.mxu0 0.0
    %1311 = vmatpush1.msra.mxu0 %v1111
    %1312 = vmatprep.subr.mxu0 0.0
    %1313 = vmatpush1.msra.mxu0 %v1110
    %1314 = vmatprep.subr.mxu0 0.0
    %1315 = vmatpush1.msra.mxu0 %v1109
    %1316 = vmatprep.subr.mxu0 0.0
    %1317 = vmatpush1.msra.mxu0 %v1108
    %1318 = vmatprep.subr.mxu0 0.0
    %1319 = vmatpush1.msra.mxu0 %v1107
    %1320 = vmatprep.subr.mxu0 0.0
    %1321 = vmatpush1.msra.mxu0 %v1106
    %1322 = vmatprep.subr.mxu0 0.0
    %1323 = vmatpush2.msra.mxu0 %v1137
    %1324 = vmatprep.subr.mxu0 0.0
    %1325 = vmatpush2.msra.mxu0 %v1136
    %1326 = vmatprep.subr.mxu0 0.0
    %1327 = vmatpush2.msra.mxu0 %v1135
    %1328 = vmatprep.subr.mxu0 0.0
    %1329 = vmatpush2.msra.mxu0 %v1134
    %1330 = vmatprep.subr.mxu0 0.0
    %1331 = vmatpush2.msra.mxu0 %v1133
    %1332 = vmatprep.subr.mxu0 0.0
    %1333 = vmatpush2.msra.mxu0 %v1132
    %1334 = vmatprep.subr.mxu0 0.0
    %1335 = vmatpush2.msra.mxu0 %v1131
    %1336 = vmatprep.subr.mxu0 0.0
    %1337 = vmatpush2.msra.mxu0 %v1130
    %1338 = vmatprep.subr.mxu0 0.0
    %1339 = vmatpush2.msra.mxu0 %v1129
    %1340 = vmatprep.subr.mxu0 0.0
    %1341 = vmatpush2.msra.mxu0 %v1128
    %1342 = vmatprep.subr.mxu0 0.0
    %1343 = vmatpush2.msra.mxu0 %v1127
    %1344 = vmatprep.subr.mxu0 0.0
    %1345 = vmatpush2.msra.mxu0 %v1126
    %1346 = vmatprep.subr.mxu0 0.0
    %1347 = vmatpush2.msra.mxu0 %v1125
    %1348 = vmatprep.subr.mxu0 0.0
    %1349 = vmatpush2.msra.mxu0 %v1124
    %1350 = vmatprep.subr.mxu0 0.0
    %1351 = vmatpush2.msra.mxu0 %v1123
    %1352 = vmatprep.subr.mxu0 0.0
    %1353 = vmatpush2.msra.mxu0 %v1122
    %1354 = vmatprep.mubr.f32.mxu0 %v1013
    %1355 = vmatmul.mubr.f32.gmra.mxu0 %v1012
    %v1356 = vpop.f32.mrf.mxu0
    %v1357 = vadd.f32 %v1212, %v1356
    %v1358 = vpop.f32.mrf.mxu0
    %1359 = vmatprep.mubr.f32.mxu0 %v1017
    %1360 = vmatmul.mubr.f32.gmra.mxu0 %v1016
    %v1361 = vpop.f32.mrf.mxu0
    %v1362 = vadd.f32 %v1217, %v1361
    %v1363 = vpop.f32.mrf.mxu0
    %1364 = vmatprep.mubr.f32.mxu0 %v1021
    %1365 = vmatmul.mubr.f32.gmra.mxu0 %v1020
    %v1366 = vpop.f32.mrf.mxu0
    %v1367 = vadd.f32 %v1222, %v1366
    %v1368 = vpop.f32.mrf.mxu0
    %1369 = vmatprep.mubr.f32.mxu0 %v1025
    %1370 = vmatmul.mubr.f32.gmra.mxu0 %v1024
    %v1371 = vpop.f32.mrf.mxu0
    %v1372 = vadd.f32 %v1227, %v1371
    %v1373 = vpop.f32.mrf.mxu0
    %1374 = vmatprep.mubr.f32.mxu0 %v1029
    %1375 = vmatmul.mubr.f32.gmra.mxu0 %v1028
    %v1376 = vpop.f32.mrf.mxu0
    %v1377 = vadd.f32 %v1232, %v1376
    %v1378 = vpop.f32.mrf.mxu0
    %1379 = vmatprep.mubr.f32.mxu0 %v1033
    %1380 = vmatmul.mubr.f32.gmra.mxu0 %v1032
    %v1381 = vpop.f32.mrf.mxu0
    %v1382 = vadd.f32 %v1237, %v1381
    %v1383 = vpop.f32.mrf.mxu0
    %1384 = vmatprep.mubr.f32.mxu0 %v1037
    %1385 = vmatmul.mubr.f32.gmra.mxu0 %v1036
    %v1386 = vpop.f32.mrf.mxu0
    %v1387 = vadd.f32 %v1242, %v1386
    %v1388 = vpop.f32.mrf.mxu0
    %1389 = vmatprep.mubr.f32.mxu0 %v1041
    %1390 = vmatmul.mubr.f32.gmra.mxu0 %v1040
    %v1391 = vpop.f32.mrf.mxu0
    %v1392 = vadd.f32 %v1247, %v1391
    %v1393 = vpop.f32.mrf.mxu0
    %1394 = vmatprep.mubr.f32.mxu0 %v1045
    %1395 = vmatmul.mubr.f32.gmra.mxu0 %v1044
    %v1396 = vpop.f32.mrf.mxu0
    %v1397 = vadd.f32 %v1252, %v1396
    %v1398 = vpop.f32.mrf.mxu0
    %1399 = vmatprep.mubr.f32.mxu0 %v1049
    %1400 = vmatmul.mubr.f32.gmra.mxu0 %v1048
    %v1401 = vpop.f32.mrf.mxu0
    %v1402 = vadd.f32 %v1257, %v1401
    %v1403 = vpop.f32.mrf.mxu0
    %1404 = vmatprep.mubr.f32.mxu0 %v1053
    %1405 = vmatmul.mubr.f32.gmra.mxu0 %v1052
    %v1406 = vpop.f32.mrf.mxu0
    %v1407 = vadd.f32 %v1262, %v1406
    %v1408 = vpop.f32.mrf.mxu0
    %1409 = vmatprep.mubr.f32.mxu0 %v1057
    %1410 = vmatmul.mubr.f32.gmra.mxu0 %v1056
    %v1411 = vpop.f32.mrf.mxu0
    %v1412 = vadd.f32 %v1267, %v1411
    %v1413 = vpop.f32.mrf.mxu0
    %1414 = vmatprep.mubr.f32.mxu0 %v1061
    %1415 = vmatmul.mubr.f32.gmra.mxu0 %v1060
    %v1416 = vpop.f32.mrf.mxu0
    %v1417 = vadd.f32 %v1272, %v1416
    %v1418 = vpop.f32.mrf.mxu0
    %1419 = vmatprep.mubr.f32.mxu0 %v1065
    %1420 = vmatmul.mubr.f32.gmra.mxu0 %v1064
    %v1421 = vpop.f32.mrf.mxu0
    %v1422 = vadd.f32 %v1277, %v1421
    %v1423 = vpop.f32.mrf.mxu0
    %1424 = vmatprep.mubr.f32.mxu0 %v1069
    %1425 = vmatmul.mubr.f32.gmra.mxu0 %v1068
    %v1426 = vpop.f32.mrf.mxu0
    %v1427 = vadd.f32 %v1282, %v1426
    %v1428 = vpop.f32.mrf.mxu0
    %1429 = vmatprep.mubr.f32.mxu0 %v1073
    %1430 = vmatmul.mubr.f32.gmra.mxu0 %v1072
    %v1431 = vpop.f32.mrf.mxu0
    %v1432 = vadd.f32 %v1287, %v1431
    %v1433 = vpop.f32.mrf.mxu0
    %1434 = vdwg.mxu0
    %1435 = vst [vmem:[#allocation10] sm:$0xff] %v1357
    %1436 = vst [vmem:[#allocation10 + $0x8] sm:$0xff] %v1362
    %1437 = vst [vmem:[#allocation10 + $0x10] sm:$0xff] %v1367
    %1438 = vst [vmem:[#allocation10 + $0x18] sm:$0xff] %v1372
    %1439 = vst [vmem:[#allocation10 + $0x20] sm:$0xff] %v1377
    %1440 = vst [vmem:[#allocation10 + $0x28] sm:$0xff] %v1382
    %1441 = vst [vmem:[#allocation10 + $0x30] sm:$0xff] %v1387
    %1442 = vst [vmem:[#allocation10 + $0x38] sm:$0xff] %v1392
    %1443 = vst [vmem:[#allocation10 + $0x40] sm:$0xff] %v1397
    %1444 = vst [vmem:[#allocation10 + $0x48] sm:$0xff] %v1402
    %1445 = vst [vmem:[#allocation10 + $0x50] sm:$0xff] %v1407
    %1446 = vst [vmem:[#allocation10 + $0x58] sm:$0xff] %v1412
    %1447 = vst [vmem:[#allocation10 + $0x60] sm:$0xff] %v1417
    %1448 = vst [vmem:[#allocation10 + $0x68] sm:$0xff] %v1422
    %1449 = vst [vmem:[#allocation10 + $0x70] sm:$0xff] %v1427
    %1450 = vst [vmem:[#allocation10 + $0x78] sm:$0xff] %v1432
    // Predicated region
    $region38: #{_mlp_resident_call.1} parent=1 // pred_check
      _
    $region39: #{_mlp_resident_call.1} parent=1 // pred_check_branch
      %1452 = sbr.rel (0) target = $region41
    $region40: #{_mlp_resident_call.1} parent=1 // pred_region
      %s1454 = ssub.s32 2048, 2048
      %1455 = vsyncadd [#allocation4], %s1454
      %s1456 = sshll.u32 [#allocation10], 4
      %s1457 = int_to_ptr.vmem [resolvable:$true] %s1456
      %1462 = dma.vmem_to_hbm [thread:$0]  %s1457, 2048, %s5, [#allocation4], 128, 128, 8
    $region41: #{_mlp_resident_call.1} parent=1 // pred_fallthru
      _
    // Predicated region
    $region42: #{_mlp_resident_call.1} parent=1 // pred_check
      _
    $region43: #{_mlp_resident_call.1} parent=1 // pred_check_branch
      %1464 = sbr.rel (0) target = $region45
    $region44: #{_mlp_resident_call.1} parent=1 // pred_region
      %1465 = dma.done [#allocation4], 2048
    $region45: #{_mlp_resident_call.1} parent=1 // pred_fallthru
      _
    %1466 = vsyncpa [#allocation3], 1
    %1467 = vsyncpa [#allocation6], 1
    %1468 = vsyncpa [#allocation9], 1
    %1469 = vsyncpa [#allocation4], 1

</llo_original>
